<compile_context>
chip_gen: v6e
topology: v6e:2x2x1
jax: 0.10.0
libtpu: 0.0.40
codegen_flags: <defaults>
</compile_context>

<pallas_src>
import functools

import jax
import jax.numpy as jnp
from jax.experimental import pallas as pl
from jax.experimental.pallas import tpu as pltpu

_LANE = 128          # minimum Cout tile width (lane dim)
_NEG_SLOPE = 0.2     # LeakyReLU negative slope


def _round_up(x, m):
    return ((x + m - 1) // m) * m


def _conv_block_kernel(x_ref, w_ref, b_ref, o_ref, patch_ref, *,
                       KH, KW, Cin, OH, OW_pad, K, K_pad):
    """One (batch element, Cout tile) per grid step.

    x_ref    : (1, H, W_pad, Cin)          input image (compute dtype)
    w_ref    : (K_pad, TCOUT)              flattened weight tile, rows ordered
                                           (kw, kh, ci), zero-padded K rows
    b_ref    : (1, TCOUT)                  bias tile (float32)
    o_ref    : (1, OH, OW_pad, TCOUT)      output tile (lane-dense)
    patch_ref: VMEM (OH*OW_pad, K_pad)     im2col scratch (compute dtype)
    """
    ohow = OH * OW_pad
    tap_w = KH * Cin  # lane width written per kw

    # Zero the K-pad lanes every step.  Cheap, and unconditionally correct even
    # when the "parallel" grid axes are sharded across TensorCores (each core
    # has its own uninitialised scratch, so a program_id==0 guard is unsafe).
    if K_pad > K:
        patch_ref[:, K:] = jnp.zeros((ohow, K_pad - K), dtype=patch_ref.dtype)

    # In-kernel im2col, grouped per kw: one lane-contiguous store of width
    # KH*Cin per kw.  The kw shift is a ref-level slice (no whole-image value),
    # the kh shift is a cheap leading-axis value slice.
    for kw in range(KW):
        x_kw = x_ref[0, :, kw:kw + OW_pad, :]                 # (H, OW_pad, Cin)
        chunk = jnp.concatenate(
            [x_kw[kh:kh + OH] for kh in range(KH)], axis=-1)  # (OH, OW_pad, KH*Cin)
        # OW_pad % 8 == 0, so this reshape is layout-preserving (no VMEM copy).
        patch_ref[:, kw * tap_w:(kw + 1) * tap_w] = chunk.reshape(ohow, tap_w)

    # Single fat MXU contraction: (OH*OW_pad, K_pad) x (K_pad, TCOUT).
    acc = jnp.dot(patch_ref[...], w_ref[...], preferred_element_type=jnp.float32)

    # f32 epilogue: bias + LeakyReLU(0.2).
    acc = acc + b_ref[...]                                     # (1, TCOUT) bcast
    acc = jnp.where(acc > 0, acc, _NEG_SLOPE * acc)

    # Split 8-aligned sublane dim only -> layout-preserving reshape.
    o_ref[0] = acc.reshape(OH, OW_pad, -1).astype(o_ref.dtype)


def conv_block_nhwc(x_nhwc, weight, bias, *, compute_dtype=jnp.bfloat16,
                    out_dtype=None, cout_tile=None):
    """ConvBlock forward on NHWC input (preferred entry point, no transposes).

    x_nhwc : (N, H, W, Cin)
    weight : (Cout, Cin, KH, KW)   (PyTorch Conv2d layout)
    bias   : (Cout,)
    returns: (N, OH, OW, Cout) in `out_dtype` (defaults to x dtype)
    """
    N, H, W, Cin = x_nhwc.shape
    Cout, _, KH, KW = weight.shape
    OH, OW = H - KH + 1, W - KW + 1                # stride 1, padding 0
    out_dtype = x_nhwc.dtype if out_dtype is None else out_dtype

    # Cout tile: 128 lanes minimum; 256 fills the v6e/v7x 2x256 MXU N dim when
    # Cout is large enough.  Production should keep Cout % 128 == 0 so the
    # trailing slice below is a no-op fused into the consumer.
    if cout_tile is None:
        cout_tile = 256 if Cout >= 256 else _LANE
    cout_p = _round_up(Cout, cout_tile)
    n_cout_tiles = cout_p // cout_tile

    # Pad W so OW is a multiple of 8 (sublane tile): makes every in-kernel
    # reshape layout-preserving.  Extra output columns are sliced off below.
    OW_pad = _round_up(OW, 8)
    W_pad = OW_pad + KW - 1
    if W_pad > W:
        x_nhwc = jnp.pad(x_nhwc, ((0, 0), (0, 0), (0, W_pad - W), (0, 0)))

    # Pad K to a full MXU K dimension (the (K, 128) tile is physically padded
    # to 128 lanes in VMEM anyway, so this costs no extra footprint).
    K = KH * KW * Cin
    K_pad = _round_up(K, 128)

    # Weights -> (K_pad, Cout_p); row index = (kw*KH + kh)*Cin + ci, matching
    # the kernel's grouped-per-kw im2col packing order.  Pad rows/cols are 0.
    w_flat = jnp.transpose(weight, (3, 2, 1, 0)).reshape(K, Cout)
    w_flat = jnp.pad(w_flat, ((0, K_pad - K), (0, cout_p - Cout))).astype(compute_dtype)
    b_pad = jnp.pad(bias.astype(jnp.float32), (0, cout_p - Cout)).reshape(1, cout_p)
    x_in = x_nhwc.astype(compute_dtype)

    kernel = functools.partial(_conv_block_kernel, KH=KH, KW=KW, Cin=Cin,
                               OH=OH, OW_pad=OW_pad, K=K, K_pad=K_pad)

    out = pl.pallas_call(
        kernel,
        out_shape=jax.ShapeDtypeStruct((N, OH, OW_pad, cout_p), out_dtype),
        grid_spec=pltpu.PrefetchScalarGridSpec(
            num_scalar_prefetch=0,
            grid=(N, n_cout_tiles),
            in_specs=[
                # Image block index constant across the cout axis -> no re-DMA.
                pl.BlockSpec((1, H, W_pad, Cin), lambda n, c: (n, 0, 0, 0)),
                pl.BlockSpec((K_pad, cout_tile), lambda n, c: (0, c)),
                pl.BlockSpec((1, cout_tile), lambda n, c: (0, c)),
            ],
            out_specs=pl.BlockSpec((1, OH, OW_pad, cout_tile),
                                   lambda n, c: (n, 0, 0, c)),
            scratch_shapes=[pltpu.VMEM((OH * OW_pad, K_pad), compute_dtype)],
        ),
        compiler_params=pltpu.CompilerParams(
            dimension_semantics=("parallel", "parallel")),
    )(x_in, w_flat, b_pad)

    # Strip the OW / Cout padding (fuses with the consumer under jit).
    return out[:, :, :OW, :Cout]


def conv_block(x_nchw, weight, bias, *, compute_dtype=jnp.bfloat16,
               out_dtype=None, cout_tile=None):
    """PyTorch-parity NCHW wrapper (layout glue only; prefer conv_block_nhwc)."""
    x_nhwc = jnp.transpose(x_nchw, (0, 2, 3, 1))
    out_nhwc = conv_block_nhwc(x_nhwc, weight, bias, compute_dtype=compute_dtype,
                               out_dtype=out_dtype, cout_tile=cout_tile)
    return jnp.transpose(out_nhwc, (0, 3, 1, 2))


def reference_conv_block(x_nchw, weight, bias):
    """Pure-JAX reference (lax conv + bias + LeakyReLU(0.2))."""
    out = jax.lax.conv_general_dilated(
        x_nchw, weight, window_strides=(1, 1), padding="VALID",
        dimension_numbers=("NCHW", "OIHW", "NCHW"))
    out = out + bias[None, :, None, None]
    return jnp.where(out > 0, out, 0.2 * out)


if __name__ == "__main__":
    # Small deterministic setup: batch=2, in_channels=4, out_channels=8, 16x16.
    key = jax.random.PRNGKey(0)
    k_x, k_w, k_b = jax.random.split(key, 3)

    N, Cin, H, W = 2, 4, 16, 16
    Cout, KH, KW = 8, 3, 3

    x = jax.random.normal(k_x, (N, Cin, H, W), dtype=jnp.float32)
    fan_in = Cin * KH * KW
    bound = 1.0 / (fan_in ** 0.5)
    weight = jax.random.uniform(k_w, (Cout, Cin, KH, KW), jnp.float32,
                                minval=-bound, maxval=bound)
    bias = jax.random.uniform(k_b, (Cout,), jnp.float32,
                              minval=-bound, maxval=bound)

    ref = jax.block_until_ready(reference_conv_block(x, weight, bias))

    # Exact-path check with f32 operands (tight tolerance).
    out_f32 = jax.block_until_ready(
        jax.jit(functools.partial(conv_block, compute_dtype=jnp.float32))(
            x, weight, bias))
    assert out_f32.shape == (N, Cout, H - KH + 1, W - KW + 1)
    assert jnp.allclose(out_f32, ref, atol=1e-4, rtol=1e-4), "f32 mismatch"

    # Default bf16 operands (MXU-native); f32 accumulate -> loose tolerance.
    out_bf16 = jax.block_until_ready(jax.jit(conv_block)(x, weight, bias))
    assert out_bf16.shape == (N, Cout, H - KH + 1, W - KW + 1)
    assert jnp.allclose(out_bf16, ref, atol=5e-2, rtol=5e-2), "bf16 mismatch"

    print("KERNEL_OK")
</pallas_src>

<mosaic_0001>
module attributes {stable_mosaic.version = 11 : i64} {
  func.func @_conv_block_kernel(%arg0: i32, %arg1: i32, %arg2: memref<1x16x18x4xf32, #tpu.memory_space<vmem>>, %arg3: memref<128x128xf32, #tpu.memory_space<vmem>>, %arg4: memref<1x128xf32, #tpu.memory_space<vmem>>, %arg5: memref<1x14x16x128xf32, #tpu.memory_space<vmem>>, %arg6: memref<224x128xf32, #tpu.memory_space<vmem>>) attributes {dimension_semantics = [#tpu.dimension_semantics<parallel>, #tpu.dimension_semantics<parallel>], iteration_bounds = array<i64: 2, 1>, scalar_prefetch = 0 : i64, scratch_operands = 1 : i64, tpu.core_type = #tpu.core_type<tc>, window_params = [{transform_indices = @transform_0, window_bounds = array<i64: 1, 16, 18, 4>}, {transform_indices = @transform_1, window_bounds = array<i64: 128, 128>}, {transform_indices = @transform_2, window_bounds = array<i64: 1, 128>}, {transform_indices = @transform_3, window_bounds = array<i64: 1, 14, 16, 128>}]} {
    %cst = arith.constant 0.000000e+00 : f32
    %0 = vector.broadcast %cst : f32 to vector<224x92xf32>
    %c0 = arith.constant 0 : index
    %c36 = arith.constant 36 : index
    %1 = vector.load %arg6[%c0, %c36] : memref<224x128xf32, #tpu.memory_space<vmem>>, vector<224x92xf32>
    tpu.vector_store %arg6[%c0, %c36], %0 {strides = array<i32>} : memref<224x128xf32, #tpu.memory_space<vmem>>, vector<224x92xf32>,
    %c0_0 = arith.constant 0 : index
    %c0_1 = arith.constant 0 : index
    %c0_2 = arith.constant 0 : index
    %c0_3 = arith.constant 0 : index
    %2 = vector.load %arg2[%c0_0, %c0_1, %c0_2, %c0_3] : memref<1x16x18x4xf32, #tpu.memory_space<vmem>>, vector<1x16x16x4xf32>
    %3 = vector.shape_cast %2 : vector<1x16x16x4xf32> to vector<16x16x4xf32>
    %4 = vector.extract_strided_slice %3 {offsets = [0, 0, 0], sizes = [14, 16, 4], strides = [1, 1, 1]} : vector<16x16x4xf32> to vector<14x16x4xf32>
    %5 = vector.extract_strided_slice %3 {offsets = [1, 0, 0], sizes = [14, 16, 4], strides = [1, 1, 1]} : vector<16x16x4xf32> to vector<14x16x4xf32>
    %6 = vector.extract_strided_slice %3 {offsets = [2, 0, 0], sizes = [14, 16, 4], strides = [1, 1, 1]} : vector<16x16x4xf32> to vector<14x16x4xf32>
    %7 = tpu.concatenate %4, %5, %6 in 2 : vector<14x16x4xf32>, vector<14x16x4xf32>, vector<14x16x4xf32> -> vector<14x16x12xf32>
    %8 = vector.shape_cast %7 : vector<14x16x12xf32> to vector<224x12xf32>
    %c0_4 = arith.constant 0 : index
    %c0_5 = arith.constant 0 : index
    %9 = vector.load %arg6[%c0_4, %c0_5] : memref<224x128xf32, #tpu.memory_space<vmem>>, vector<224x12xf32>
    tpu.vector_store %arg6[%c0_4, %c0_5], %8 {strides = array<i32>} : memref<224x128xf32, #tpu.memory_space<vmem>>, vector<224x12xf32>,
    %c0_6 = arith.constant 0 : index
    %c0_7 = arith.constant 0 : index
    %c1 = arith.constant 1 : index
    %c0_8 = arith.constant 0 : index
    %10 = vector.load %arg2[%c0_6, %c0_7, %c1, %c0_8] : memref<1x16x18x4xf32, #tpu.memory_space<vmem>>, vector<1x16x16x4xf32>
    %11 = vector.shape_cast %10 : vector<1x16x16x4xf32> to vector<16x16x4xf32>
    %12 = vector.extract_strided_slice %11 {offsets = [0, 0, 0], sizes = [14, 16, 4], strides = [1, 1, 1]} : vector<16x16x4xf32> to vector<14x16x4xf32>
    %13 = vector.extract_strided_slice %11 {offsets = [1, 0, 0], sizes = [14, 16, 4], strides = [1, 1, 1]} : vector<16x16x4xf32> to vector<14x16x4xf32>
    %14 = vector.extract_strided_slice %11 {offsets = [2, 0, 0], sizes = [14, 16, 4], strides = [1, 1, 1]} : vector<16x16x4xf32> to vector<14x16x4xf32>
    %15 = tpu.concatenate %12, %13, %14 in 2 : vector<14x16x4xf32>, vector<14x16x4xf32>, vector<14x16x4xf32> -> vector<14x16x12xf32>
    %16 = vector.shape_cast %15 : vector<14x16x12xf32> to vector<224x12xf32>
    %c0_9 = arith.constant 0 : index
    %c12 = arith.constant 12 : index
    %17 = vector.load %arg6[%c0_9, %c12] : memref<224x128xf32, #tpu.memory_space<vmem>>, vector<224x12xf32>
    tpu.vector_store %arg6[%c0_9, %c12], %16 {strides = array<i32>} : memref<224x128xf32, #tpu.memory_space<vmem>>, vector<224x12xf32>,
    %c0_10 = arith.constant 0 : index
    %c0_11 = arith.constant 0 : index
    %c2 = arith.constant 2 : index
    %c0_12 = arith.constant 0 : index
    %18 = vector.load %arg2[%c0_10, %c0_11, %c2, %c0_12] : memref<1x16x18x4xf32, #tpu.memory_space<vmem>>, vector<1x16x16x4xf32>
    %19 = vector.shape_cast %18 : vector<1x16x16x4xf32> to vector<16x16x4xf32>
    %20 = vector.extract_strided_slice %19 {offsets = [0, 0, 0], sizes = [14, 16, 4], strides = [1, 1, 1]} : vector<16x16x4xf32> to vector<14x16x4xf32>
    %21 = vector.extract_strided_slice %19 {offsets = [1, 0, 0], sizes = [14, 16, 4], strides = [1, 1, 1]} : vector<16x16x4xf32> to vector<14x16x4xf32>
    %22 = vector.extract_strided_slice %19 {offsets = [2, 0, 0], sizes = [14, 16, 4], strides = [1, 1, 1]} : vector<16x16x4xf32> to vector<14x16x4xf32>
    %23 = tpu.concatenate %20, %21, %22 in 2 : vector<14x16x4xf32>, vector<14x16x4xf32>, vector<14x16x4xf32> -> vector<14x16x12xf32>
    %24 = vector.shape_cast %23 : vector<14x16x12xf32> to vector<224x12xf32>
    %c0_13 = arith.constant 0 : index
    %c24 = arith.constant 24 : index
    %25 = vector.load %arg6[%c0_13, %c24] : memref<224x128xf32, #tpu.memory_space<vmem>>, vector<224x12xf32>
    tpu.vector_store %arg6[%c0_13, %c24], %24 {strides = array<i32>} : memref<224x128xf32, #tpu.memory_space<vmem>>, vector<224x12xf32>,
    %c0_14 = arith.constant 0 : index
    %c0_15 = arith.constant 0 : index
    %26 = vector.load %arg6[%c0_14, %c0_15] : memref<224x128xf32, #tpu.memory_space<vmem>>, vector<224x128xf32>
    %c0_16 = arith.constant 0 : index
    %c0_17 = arith.constant 0 : index
    %27 = vector.load %arg3[%c0_16, %c0_17] : memref<128x128xf32, #tpu.memory_space<vmem>>, vector<128x128xf32>
    %cst_18 = arith.constant dense<0.000000e+00> : vector<224x128xf32>
    %28 = tpu.matmul %26, %27, %cst_18 {dimension_numbers = #tpu.dot_dimension_numbers<[1], [0], [0], [1], [0, 0, 1, 1], [], []>} : vector<224x128xf32>, vector<128x128xf32>, vector<224x128xf32> -> vector<224x128xf32>
    %c0_19 = arith.constant 0 : index
    %c0_20 = arith.constant 0 : index
    %29 = vector.load %arg4[%c0_19, %c0_20] : memref<1x128xf32, #tpu.memory_space<vmem>>, vector<1x128xf32>
    %30 = vector.broadcast %29 : vector<1x128xf32> to vector<224x128xf32>
    %31 = arith.addf %28, %30 : vector<224x128xf32>
    %cst_21 = arith.constant 0.000000e+00 : f32
    %32 = vector.broadcast %cst_21 : f32 to vector<224x128xf32>
    %33 = arith.cmpf ogt, %31, %32 : vector<224x128xf32>
    %cst_22 = arith.constant 2.000000e-01 : f32
    %34 = vector.broadcast %cst_22 : f32 to vector<224x128xf32>
    %35 = arith.mulf %34, %31 : vector<224x128xf32>
    %36 = arith.select %33, %31, %35 : vector<224x128xi1>, vector<224x128xf32>
    %37 = vector.shape_cast %36 : vector<224x128xf32> to vector<14x16x128xf32>
    %c0_23 = arith.constant 0 : index
    %c0_24 = arith.constant 0 : index
    %c0_25 = arith.constant 0 : index
    %c0_26 = arith.constant 0 : index
    %38 = vector.load %arg5[%c0_23, %c0_24, %c0_25, %c0_26] : memref<1x14x16x128xf32, #tpu.memory_space<vmem>>, vector<1x14x16x128xf32>
    %39 = vector.shape_cast %38 : vector<1x14x16x128xf32> to vector<14x16x128xf32>
    %40 = vector.shape_cast %37 : vector<14x16x128xf32> to vector<1x14x16x128xf32>
    tpu.vector_store %arg5[%c0_23, %c0_24, %c0_25, %c0_26], %40 {strides = array<i32>} : memref<1x14x16x128xf32, #tpu.memory_space<vmem>>, vector<1x14x16x128xf32>,
    return
  }
  func.func @transform_0(%arg0: i32, %arg1: i32) -> (i32, i32, i32, i32) {
    %c0_i32 = arith.constant 0 : i32
    %c0_i32_0 = arith.constant 0 : i32
    %c0_i32_1 = arith.constant 0 : i32
    %c0_i32_2 = arith.constant 0 : i32
    return %arg0, %c0_i32, %c0_i32_0, %c0_i32_1 : i32, i32, i32, i32
  }
  func.func @transform_1(%arg0: i32, %arg1: i32) -> (i32, i32) {
    %c0_i32 = arith.constant 0 : i32
    %c0_i32_0 = arith.constant 0 : i32
    return %c0_i32, %arg1 : i32, i32
  }
  func.func @transform_2(%arg0: i32, %arg1: i32) -> (i32, i32) {
    %c0_i32 = arith.constant 0 : i32
    %c0_i32_0 = arith.constant 0 : i32
    return %c0_i32, %arg1 : i32, i32
  }
  func.func @transform_3(%arg0: i32, %arg1: i32) -> (i32, i32, i32, i32) {
    %c0_i32 = arith.constant 0 : i32
    %c0_i32_0 = arith.constant 0 : i32
    %c0_i32_1 = arith.constant 0 : i32
    return %arg0, %c0_i32, %c0_i32_0, %arg1 : i32, i32, i32, i32
  }
}

</mosaic_0001>

<llo_original>
// kernel: conv_block.1
$region0: #{conv_block.1}
  #allocation0 [shape = 'u32[]', space=smem, size = 0x4, offset = 0x4, fixed_abs, tag = 'smem constant byte address 0x4 - core index']
  #allocation1 [shape = 'u32[144,128]{1,0:T(1,128)}', space=vmem, size = 0x12000, scoped, tag = 'internal scratch']
  #allocation2 [shape = 'f32[224,128]{1,0:T(8,128)}', space=vmem, size = 0x1c000, scoped, tag = 'scratch operand']
  %s0 = inlined_call_operand.vmem [shape: f32[2,16,18,4], index: 0, kind: input, shape index: {}]
  %s1 = inlined_call_operand.vmem [shape: f32[128,128], index: 1, kind: input, shape index: {}]
  %s2 = inlined_call_operand.vmem [shape: f32[1,128], index: 2, kind: input, shape index: {}]
  %s3 = inlined_call_operand.vmem [shape: f32[2,14,16,128], index: 3, kind: output, shape index: {}]
  %s4 = sld [smem:[#allocation0]]
  $region45: #{conv_block.1} parent=0
    _
  %s6 = ssub.s32 1, %s4
  %s7 = scalar_select 0, %s6, %s4
  loop: start=0, step=1, limit=4
  $region2: #{conv_block.1} parent=0 // loop_pre_header
    _
  $region3: #{conv_block.1} parent=0 // loop_header
    %s9 = sphi 0, %s13
    %p10 = scmp.ge.s32.totalorder %s9, 4
    %s16 = sphi 0, %s28
    %s17 = sphi 0, %s24
    %s18 = sphi 0, %s16
    %s19 = sphi 0, %s17
    %s20 = sphi 0, %s18
    %s21 = sphi 0, %s19
    %s31 = sphi 0, %s33
    %s34 = sphi 0, %s31
    %s35 = sphi 0, %s34
    %s51 = sphi 0, %s35
    %s57 = sphi 0, %s59
    %s60 = sphi 0, %s57
    %s61 = sphi 0, %s60
    %s77 = sphi 0, %s61
    %s83 = sphi 0, %s85
    %s86 = sphi 0, %s83
    %s87 = sphi 0, %s86
    %s103 = sphi 0, %s87
    %s111 = sphi 0, %s113
    %s114 = sphi 0, %s111
    %s115 = sphi 0, %s114
    %s131 = sphi 0, %s115
  $region4: #{conv_block.1} parent=0 // loop_header_branch
    %12 = sbr.rel (%p10) target = $region8
  $region5: #{conv_block.1} parent=0 // loop_body
    %s14 = ssub.s32 %s9, 1
    %s15 = ssub.s32 %s9, 2
    %s22 = sadd.s32 1, %s17
    %p23 = scmp.ge.s32.totalorder %s22, 1
    %s24 = scalar_select %p23, 0, %s22
    %s25 = sadd.s32 1, %s16
    %s26 = scalar_select %p23, %s25, %s16
    %p27 = scmp.ge.s32.totalorder %s26, 2
    %s28 = scalar_select %p27, 0, %s26
    %s29 = ssub.s32 %s16, %s28
    %p30 = scmp.eq.s32.totalorder %s29, 0
    %s32 = sadd.s32 %s31, 1
    %s33 = scalar_select %p30, %s31, %s32
    %p36 = pneg %p30
    %p37 = scmp.eq.s32.totalorder %s9, 1
    %p38 = por %p36, %p37
    %p39 = scmp.ne.s32.totalorder %s31, %s34
    %p40 = scmp.eq.s32.totalorder %s9, 0
    %p41 = por %p39, %p40
    %p42 = scmp.ne.s32.totalorder %s31, %s34
    %p43 = scmp.eq.s32.totalorder %s14, 1
    %p44 = por %p42, %p43
    %p45 = scmp.ne.s32.totalorder %s34, %s35
    %p46 = scmp.eq.s32.totalorder %s14, 0
    %p47 = por %p45, %p46
    %p48 = scmp.ne.s32.totalorder %s34, %s35
    %p49 = scmp.eq.s32.totalorder %s15, 1
    %p50 = por %p48, %p49
    %p52 = scmp.ne.s32.totalorder %s35, %s51
    %p53 = scmp.eq.s32.totalorder %s15, 0
    %p54 = por %p52, %p53
    %s55 = ssub.s32 %s17, %s24
    %p56 = scmp.eq.s32.totalorder %s55, 0
    %s58 = sadd.s32 %s57, 1
    %s59 = scalar_select %p56, %s57, %s58
    %p62 = pneg %p56
    %p63 = scmp.eq.s32.totalorder %s9, 1
    %p64 = por %p62, %p63
    %p65 = scmp.ne.s32.totalorder %s57, %s60
    %p66 = scmp.eq.s32.totalorder %s9, 0
    %p67 = por %p65, %p66
    %p68 = scmp.ne.s32.totalorder %s57, %s60
    %p69 = scmp.eq.s32.totalorder %s14, 1
    %p70 = por %p68, %p69
    %p71 = scmp.ne.s32.totalorder %s60, %s61
    %p72 = scmp.eq.s32.totalorder %s14, 0
    %p73 = por %p71, %p72
    %p74 = scmp.ne.s32.totalorder %s60, %s61
    %p75 = scmp.eq.s32.totalorder %s15, 1
    %p76 = por %p74, %p75
    %p78 = scmp.ne.s32.totalorder %s61, %s77
    %p79 = scmp.eq.s32.totalorder %s15, 0
    %p80 = por %p78, %p79
    %s81 = ssub.s32 %s17, %s24
    %p82 = scmp.eq.s32.totalorder %s81, 0
    %s84 = sadd.s32 %s83, 1
    %s85 = scalar_select %p82, %s83, %s84
    %p88 = pneg %p82
    %p89 = scmp.eq.s32.totalorder %s9, 1
    %p90 = por %p88, %p89
    %p91 = scmp.ne.s32.totalorder %s83, %s86
    %p92 = scmp.eq.s32.totalorder %s9, 0
    %p93 = por %p91, %p92
    %p94 = scmp.ne.s32.totalorder %s83, %s86
    %p95 = scmp.eq.s32.totalorder %s14, 1
    %p96 = por %p94, %p95
    %p97 = scmp.ne.s32.totalorder %s86, %s87
    %p98 = scmp.eq.s32.totalorder %s14, 0
    %p99 = por %p97, %p98
    %p100 = scmp.ne.s32.totalorder %s86, %s87
    %p101 = scmp.eq.s32.totalorder %s15, 1
    %p102 = por %p100, %p101
    %p104 = scmp.ne.s32.totalorder %s87, %s103
    %p105 = scmp.eq.s32.totalorder %s15, 0
    %p106 = por %p104, %p105
    %s107 = ssub.s32 %s16, %s28
    %s108 = ssub.s32 %s17, %s24
    %s109 = sor.u32 %s107, %s108
    %p110 = scmp.eq.s32.totalorder %s109, 0
    %s112 = sadd.s32 %s111, 1
    %s113 = scalar_select %p110, %s111, %s112
    %p116 = pneg %p110
    %p117 = scmp.eq.s32.totalorder %s9, 1
    %p118 = por %p116, %p117
    %p119 = scmp.ne.s32.totalorder %s111, %s114
    %p120 = scmp.eq.s32.totalorder %s9, 0
    %p121 = por %p119, %p120
    %p122 = scmp.ne.s32.totalorder %s111, %s114
    %p123 = scmp.eq.s32.totalorder %s14, 1
    %p124 = por %p122, %p123
    %p125 = scmp.ne.s32.totalorder %s114, %s115
    %p126 = scmp.eq.s32.totalorder %s14, 0
    %p127 = por %p125, %p126
    %p128 = scmp.ne.s32.totalorder %s114, %s115
    %p129 = scmp.eq.s32.totalorder %s15, 1
    %p130 = por %p128, %p129
    %p132 = scmp.ne.s32.totalorder %s115, %s131
    %p133 = scmp.eq.s32.totalorder %s15, 0
    %p134 = por %p132, %p133
    %p135 = scmp.le.s32.totalorder 1, %s9
    %p136 = scmp.lt.s32.totalorder %s9, 3
    %p137 = pnand %p135, %p136
    %p138 = pneg %p137
    // Predicated region
    $region9: #{conv_block.1} parent=5 // pred_check
      _
    $region10: #{conv_block.1} parent=5 // pred_check_branch
      %140 = sbr.rel (%p137) target = $region12
    $region11: #{conv_block.1} parent=5 // pred_region
      %s141 = ssub.s32 %s9, 1
      // Predicated region
      $region13: #{conv_block.1} parent=11 // pred_check
        %p142 = pneg %p73
      $region14: #{conv_block.1} parent=11 // pred_check_branch
        %144 = sbr.rel (%p142) target = $region16
      $region15: #{conv_block.1} parent=11 // pred_region
        %p145 = scmp.lt.s32.totalorder %s19, 0
        %s146 = scalar_select %p145, %s19, 0
        %s147 = smul.addr %s146, 8
        %s148 = scalar_lea.vmem %s1, %s147
      $region16: #{conv_block.1} parent=11 // pred_fallthru
        _
      // Predicated region
      $region17: #{conv_block.1} parent=11 // pred_check
        %p149 = pneg %p99
      $region18: #{conv_block.1} parent=11 // pred_check_branch
        %151 = sbr.rel (%p149) target = $region20
      $region19: #{conv_block.1} parent=11 // pred_region
        %p152 = scmp.lt.s32.totalorder %s19, 0
        %s153 = scalar_select %p152, %s19, 0
        %s154 = scalar_lea.vmem %s2, %s153
      $region20: #{conv_block.1} parent=11 // pred_fallthru
        _
    $region12: #{conv_block.1} parent=5 // pred_fallthru
      _
    %p155 = scmp.lt.s32.totalorder %s9, 2
    // Predicated region
    $region21: #{conv_block.1} parent=5 // pred_check
      %p156 = pneg %p155
    $region22: #{conv_block.1} parent=5 // pred_check_branch
      %158 = sbr.rel (%p156) target = $region24
    $region23: #{conv_block.1} parent=5 // pred_region
      // Predicated region
      $region25: #{conv_block.1} parent=23 // pred_check
        %p159 = pneg %p41
      $region26: #{conv_block.1} parent=23 // pred_check_branch
        %161 = sbr.rel (%p159) target = $region28
      $region27: #{conv_block.1} parent=23 // pred_region
        %p162 = scmp.lt.s32.totalorder %s16, 1
        %s163 = scalar_select %p162, %s16, 1
        %s164 = smul.addr %s163, 48
        %s165 = smul.addr %s164, 8
        %s166 = scalar_lea.vmem %s0, %s165
      $region28: #{conv_block.1} parent=23 // pred_fallthru
        _
    $region24: #{conv_block.1} parent=5 // pred_fallthru
      _
    %p167 = scmp.le.s32.totalorder 1, %s9
    %p168 = scmp.lt.s32.totalorder %s9, 3
    %p169 = pnand %p167, %p168
    %p170 = pneg %p169
    // Predicated region
    $region29: #{conv_block.1} parent=5 // pred_check
      _
    $region30: #{conv_block.1} parent=5 // pred_check_branch
      %172 = sbr.rel (%p169) target = $region32
    $region31: #{conv_block.1} parent=5 // pred_region
      %s173 = ssub.s32 %s9, 1
      %p174 = scmp.lt.s32.totalorder %s18, 1
      %s175 = scalar_select %p174, %s18, 1
      %s176 = smul.addr %s175, 48
      %s177 = smul.addr %s176, 8
      %s178 = scalar_lea.vmem %s0, %s177
      %p179 = pneg %p47
      %p180 = pneg %p44
      %p181 = scmp.lt.s32.totalorder %s19, 0
      %s182 = scalar_select %p181, %s19, 0
      %s183 = smul.addr %s182, 8
      %s184 = scalar_lea.vmem %s1, %s183
      %p185 = pneg %p73
      %p186 = pneg %p70
      %p187 = scmp.lt.s32.totalorder %s19, 0
      %s188 = scalar_select %p187, %s19, 0
      %s189 = scalar_lea.vmem %s2, %s188
      %p190 = pneg %p99
      %p191 = pneg %p96
      %p192 = pneg %p127
      %p193 = pneg %p124
      %p194 = scmp.lt.s32.totalorder %s18, 1
      %s195 = scalar_select %p194, %s18, 1
      %p196 = scmp.lt.s32.totalorder %s19, 0
      %s197 = scalar_select %p196, %s19, 0
      %s198 = smul.addr %s195, 28
      %s199 = sadd.s32 %s197, %s198
      %s200 = smul.addr %s199, 8
      %s201 = scalar_lea.vmem %s3, %s200
      %p202 = scmp.lt.s32.totalorder %s18, 1
      %s203 = scalar_select %p202, %s18, 1
      %s204 = smul.addr %s203, 48
      %s205 = smul.addr %s204, 8
      %s206 = scalar_lea.vmem %s0, %s205
      %p207 = scmp.lt.s32.totalorder %s19, 0
      %s208 = scalar_select %p207, %s19, 0
      %s209 = smul.addr %s208, 8
      %s210 = scalar_lea.vmem %s1, %s209
      %p211 = scmp.lt.s32.totalorder %s19, 0
      %s212 = scalar_select %p211, %s19, 0
      %s213 = scalar_lea.vmem %s2, %s212
      %p214 = scmp.lt.s32.totalorder %s18, 1
      %s215 = scalar_select %p214, %s18, 1
      %p216 = scmp.lt.s32.totalorder %s19, 0
      %s217 = scalar_select %p216, %s19, 0
      %s218 = smul.addr %s215, 28
      %s219 = sadd.s32 %s217, %s218
      %s220 = smul.addr %s219, 8
      %s221 = scalar_lea.vmem %s3, %s220
      %vm222 = vcmask 1047840
      %223 = vst.msk [vmem:[#allocation2] sm:$0xff] %vm222, 0.0
      %224 = vst.msk [vmem:[#allocation2 + $0x8] sm:$0xff] %vm222, 0.0
      %225 = vst.msk [vmem:[#allocation2 + $0x10] sm:$0xff] %vm222, 0.0
      %226 = vst.msk [vmem:[#allocation2 + $0x18] sm:$0xff] %vm222, 0.0
      %227 = vst.msk [vmem:[#allocation2 + $0x20] sm:$0xff] %vm222, 0.0
      %228 = vst.msk [vmem:[#allocation2 + $0x28] sm:$0xff] %vm222, 0.0
      %229 = vst.msk [vmem:[#allocation2 + $0x30] sm:$0xff] %vm222, 0.0
      %230 = vst.msk [vmem:[#allocation2 + $0x38] sm:$0xff] %vm222, 0.0
      %231 = vst.msk [vmem:[#allocation2 + $0x40] sm:$0xff] %vm222, 0.0
      %232 = vst.msk [vmem:[#allocation2 + $0x48] sm:$0xff] %vm222, 0.0
      %233 = vst.msk [vmem:[#allocation2 + $0x50] sm:$0xff] %vm222, 0.0
      %234 = vst.msk [vmem:[#allocation2 + $0x58] sm:$0xff] %vm222, 0.0
      %235 = vst.msk [vmem:[#allocation2 + $0x60] sm:$0xff] %vm222, 0.0
      %236 = vst.msk [vmem:[#allocation2 + $0x68] sm:$0xff] %vm222, 0.0
      %237 = vst.msk [vmem:[#allocation2 + $0x70] sm:$0xff] %vm222, 0.0
      %238 = vst.msk [vmem:[#allocation2 + $0x78] sm:$0xff] %vm222, 0.0
      %239 = vst.msk [vmem:[#allocation2 + $0x80] sm:$0xff] %vm222, 0.0
      %240 = vst.msk [vmem:[#allocation2 + $0x88] sm:$0xff] %vm222, 0.0
      %241 = vst.msk [vmem:[#allocation2 + $0x90] sm:$0xff] %vm222, 0.0
      %242 = vst.msk [vmem:[#allocation2 + $0x98] sm:$0xff] %vm222, 0.0
      %243 = vst.msk [vmem:[#allocation2 + $0xa0] sm:$0xff] %vm222, 0.0
      %244 = vst.msk [vmem:[#allocation2 + $0xa8] sm:$0xff] %vm222, 0.0
      %245 = vst.msk [vmem:[#allocation2 + $0xb0] sm:$0xff] %vm222, 0.0
      %246 = vst.msk [vmem:[#allocation2 + $0xb8] sm:$0xff] %vm222, 0.0
      %247 = vst.msk [vmem:[#allocation2 + $0xc0] sm:$0xff] %vm222, 0.0
      %248 = vst.msk [vmem:[#allocation2 + $0xc8] sm:$0xff] %vm222, 0.0
      %249 = vst.msk [vmem:[#allocation2 + $0xd0] sm:$0xff] %vm222, 0.0
      %250 = vst.msk [vmem:[#allocation2 + $0xd8] sm:$0xff] %vm222, 0.0
      %v251 = vld [vmem:[%s206] sm:$0xff]
      %v252 = vld [vmem:[%s206 + $0x8] sm:$0xff]
      %v253 = vld [vmem:[%s206 + $0x18] sm:$0xff]
      %v254 = vld [vmem:[%s206 + $0x20] sm:$0xff]
      %v255 = vld [vmem:[%s206 + $0x30] sm:$0xff]
      %v256 = vld [vmem:[%s206 + $0x38] sm:$0xff]
      %v257 = vld [vmem:[%s206 + $0x48] sm:$0xff]
      %v258 = vld [vmem:[%s206 + $0x50] sm:$0xff]
      %v259 = vld [vmem:[%s206 + $0x60] sm:$0xff]
      %v260 = vld [vmem:[%s206 + $0x68] sm:$0xff]
      %v261 = vld [vmem:[%s206 + $0x78] sm:$0xff]
      %v262 = vld [vmem:[%s206 + $0x80] sm:$0xff]
      %v263 = vld [vmem:[%s206 + $0x90] sm:$0xff]
      %v264 = vld [vmem:[%s206 + $0x98] sm:$0xff]
      %v265 = vld [vmem:[%s206 + $0xa8] sm:$0xff]
      %v266 = vld [vmem:[%s206 + $0xb0] sm:$0xff]
      %v267 = vld [vmem:[%s206 + $0xc0] sm:$0xff]
      %v268 = vld [vmem:[%s206 + $0xc8] sm:$0xff]
      %v269 = vld [vmem:[%s206 + $0xd8] sm:$0xff]
      %v270 = vld [vmem:[%s206 + $0xe0] sm:$0xff]
      %v271 = vld [vmem:[%s206 + $0xf0] sm:$0xff]
      %v272 = vld [vmem:[%s206 + $0xf8] sm:$0xff]
      %v273 = vld [vmem:[%s206 + $0x108] sm:$0xff]
      %v274 = vld [vmem:[%s206 + $0x110] sm:$0xff]
      %v275 = vld [vmem:[%s206 + $0x120] sm:$0xff]
      %v276 = vld [vmem:[%s206 + $0x128] sm:$0xff]
      %v277 = vld [vmem:[%s206 + $0x138] sm:$0xff]
      %v278 = vld [vmem:[%s206 + $0x140] sm:$0xff]
      %v279 = vld [vmem:[%s206 + $0x150] sm:$0xff]
      %v280 = vld [vmem:[%s206 + $0x158] sm:$0xff]
      %v281 = vld [vmem:[%s206 + $0x168] sm:$0xff]
      %v282 = vld [vmem:[%s206 + $0x170] sm:$0xff]
      %311 = vrot.lane.b32.xlu0 %v253, 4
      %v312 = vpop.permute.xlu0 %311
      %313 = vrot.lane.b32.xlu0 %v254, 4
      %v314 = vpop.permute.xlu0 %313
      %315 = vrot.lane.b32.xlu0 %v255, 4
      %v316 = vpop.permute.xlu0 %315
      %317 = vrot.lane.b32.xlu0 %v256, 4
      %v318 = vpop.permute.xlu0 %317
      %319 = vrot.lane.b32.xlu0 %v257, 4
      %v320 = vpop.permute.xlu0 %319
      %321 = vrot.lane.b32.xlu0 %v258, 4
      %v322 = vpop.permute.xlu0 %321
      %323 = vrot.lane.b32.xlu0 %v259, 4
      %v324 = vpop.permute.xlu0 %323
      %325 = vrot.lane.b32.xlu0 %v260, 4
      %v326 = vpop.permute.xlu0 %325
      %327 = vrot.lane.b32.xlu0 %v261, 4
      %v328 = vpop.permute.xlu0 %327
      %329 = vrot.lane.b32.xlu0 %v262, 4
      %v330 = vpop.permute.xlu0 %329
      %331 = vrot.lane.b32.xlu0 %v263, 4
      %v332 = vpop.permute.xlu0 %331
      %333 = vrot.lane.b32.xlu0 %v264, 4
      %v334 = vpop.permute.xlu0 %333
      %335 = vrot.lane.b32.xlu0 %v265, 4
      %v336 = vpop.permute.xlu0 %335
      %337 = vrot.lane.b32.xlu0 %v266, 4
      %v338 = vpop.permute.xlu0 %337
      %339 = vrot.lane.b32.xlu0 %v267, 4
      %v340 = vpop.permute.xlu0 %339
      %341 = vrot.lane.b32.xlu0 %v268, 4
      %v342 = vpop.permute.xlu0 %341
      %343 = vrot.lane.b32.xlu0 %v269, 4
      %v344 = vpop.permute.xlu0 %343
      %345 = vrot.lane.b32.xlu0 %v270, 4
      %v346 = vpop.permute.xlu0 %345
      %347 = vrot.lane.b32.xlu0 %v271, 4
      %v348 = vpop.permute.xlu0 %347
      %349 = vrot.lane.b32.xlu0 %v272, 4
      %v350 = vpop.permute.xlu0 %349
      %351 = vrot.lane.b32.xlu0 %v273, 4
      %v352 = vpop.permute.xlu0 %351
      %353 = vrot.lane.b32.xlu0 %v274, 4
      %v354 = vpop.permute.xlu0 %353
      %355 = vrot.lane.b32.xlu0 %v275, 4
      %v356 = vpop.permute.xlu0 %355
      %357 = vrot.lane.b32.xlu0 %v276, 4
      %v358 = vpop.permute.xlu0 %357
      %359 = vrot.lane.b32.xlu0 %v277, 4
      %v360 = vpop.permute.xlu0 %359
      %361 = vrot.lane.b32.xlu0 %v278, 4
      %v362 = vpop.permute.xlu0 %361
      %363 = vrot.lane.b32.xlu0 %v279, 4
      %v364 = vpop.permute.xlu0 %363
      %365 = vrot.lane.b32.xlu0 %v280, 4
      %v366 = vpop.permute.xlu0 %365
      %397 = vrot.lane.b32.xlu0 %v255, 8
      %v398 = vpop.permute.xlu0 %397
      %399 = vrot.lane.b32.xlu0 %v256, 8
      %v400 = vpop.permute.xlu0 %399
      %401 = vrot.lane.b32.xlu0 %v257, 8
      %v402 = vpop.permute.xlu0 %401
      %403 = vrot.lane.b32.xlu0 %v258, 8
      %v404 = vpop.permute.xlu0 %403
      %405 = vrot.lane.b32.xlu0 %v259, 8
      %v406 = vpop.permute.xlu0 %405
      %407 = vrot.lane.b32.xlu0 %v260, 8
      %v408 = vpop.permute.xlu0 %407
      %409 = vrot.lane.b32.xlu0 %v261, 8
      %v410 = vpop.permute.xlu0 %409
      %411 = vrot.lane.b32.xlu0 %v262, 8
      %v412 = vpop.permute.xlu0 %411
      %413 = vrot.lane.b32.xlu0 %v263, 8
      %v414 = vpop.permute.xlu0 %413
      %415 = vrot.lane.b32.xlu0 %v264, 8
      %v416 = vpop.permute.xlu0 %415
      %417 = vrot.lane.b32.xlu0 %v265, 8
      %v418 = vpop.permute.xlu0 %417
      %419 = vrot.lane.b32.xlu0 %v266, 8
      %v420 = vpop.permute.xlu0 %419
      %421 = vrot.lane.b32.xlu0 %v267, 8
      %v422 = vpop.permute.xlu0 %421
      %423 = vrot.lane.b32.xlu0 %v268, 8
      %v424 = vpop.permute.xlu0 %423
      %425 = vrot.lane.b32.xlu0 %v269, 8
      %v426 = vpop.permute.xlu0 %425
      %427 = vrot.lane.b32.xlu0 %v270, 8
      %v428 = vpop.permute.xlu0 %427
      %429 = vrot.lane.b32.xlu0 %v271, 8
      %v430 = vpop.permute.xlu0 %429
      %431 = vrot.lane.b32.xlu0 %v272, 8
      %v432 = vpop.permute.xlu0 %431
      %433 = vrot.lane.b32.xlu0 %v273, 8
      %v434 = vpop.permute.xlu0 %433
      %435 = vrot.lane.b32.xlu0 %v274, 8
      %v436 = vpop.permute.xlu0 %435
      %437 = vrot.lane.b32.xlu0 %v275, 8
      %v438 = vpop.permute.xlu0 %437
      %439 = vrot.lane.b32.xlu0 %v276, 8
      %v440 = vpop.permute.xlu0 %439
      %441 = vrot.lane.b32.xlu0 %v277, 8
      %v442 = vpop.permute.xlu0 %441
      %443 = vrot.lane.b32.xlu0 %v278, 8
      %v444 = vpop.permute.xlu0 %443
      %445 = vrot.lane.b32.xlu0 %v279, 8
      %v446 = vpop.permute.xlu0 %445
      %447 = vrot.lane.b32.xlu0 %v280, 8
      %v448 = vpop.permute.xlu0 %447
      %449 = vrot.lane.b32.xlu0 %v281, 8
      %v450 = vpop.permute.xlu0 %449
      %451 = vrot.lane.b32.xlu0 %v282, 8
      %v452 = vpop.permute.xlu0 %451
      %vm481 = vcmask 31744
      %v482 = vsel %vm481, %v251, %v312
      %v483 = vsel %vm481, %v252, %v314
      %v484 = vsel %vm481, %v253, %v316
      %v485 = vsel %vm481, %v254, %v318
      %v486 = vsel %vm481, %v255, %v320
      %v487 = vsel %vm481, %v256, %v322
      %v488 = vsel %vm481, %v257, %v324
      %v489 = vsel %vm481, %v258, %v326
      %v490 = vsel %vm481, %v259, %v328
      %v491 = vsel %vm481, %v260, %v330
      %v492 = vsel %vm481, %v261, %v332
      %v493 = vsel %vm481, %v262, %v334
      %v494 = vsel %vm481, %v263, %v336
      %v495 = vsel %vm481, %v264, %v338
      %v496 = vsel %vm481, %v265, %v340
      %v497 = vsel %vm481, %v266, %v342
      %v498 = vsel %vm481, %v267, %v344
      %v499 = vsel %vm481, %v268, %v346
      %v500 = vsel %vm481, %v269, %v348
      %v501 = vsel %vm481, %v270, %v350
      %v502 = vsel %vm481, %v271, %v352
      %v503 = vsel %vm481, %v272, %v354
      %v504 = vsel %vm481, %v273, %v356
      %v505 = vsel %vm481, %v274, %v358
      %v506 = vsel %vm481, %v275, %v360
      %v507 = vsel %vm481, %v276, %v362
      %v508 = vsel %vm481, %v277, %v364
      %v509 = vsel %vm481, %v278, %v366
      %vm510 = vcmask 64512
      %v511 = vsel %vm510, %v482, %v398
      %v512 = vsel %vm510, %v483, %v400
      %v513 = vsel %vm510, %v484, %v402
      %v514 = vsel %vm510, %v485, %v404
      %v515 = vsel %vm510, %v486, %v406
      %v516 = vsel %vm510, %v487, %v408
      %v517 = vsel %vm510, %v488, %v410
      %v518 = vsel %vm510, %v489, %v412
      %v519 = vsel %vm510, %v490, %v414
      %v520 = vsel %vm510, %v491, %v416
      %v521 = vsel %vm510, %v492, %v418
      %v522 = vsel %vm510, %v493, %v420
      %v523 = vsel %vm510, %v494, %v422
      %v524 = vsel %vm510, %v495, %v424
      %v525 = vsel %vm510, %v496, %v426
      %v526 = vsel %vm510, %v497, %v428
      %v527 = vsel %vm510, %v498, %v430
      %v528 = vsel %vm510, %v499, %v432
      %v529 = vsel %vm510, %v500, %v434
      %v530 = vsel %vm510, %v501, %v436
      %v531 = vsel %vm510, %v502, %v438
      %v532 = vsel %vm510, %v503, %v440
      %v533 = vsel %vm510, %v504, %v442
      %v534 = vsel %vm510, %v505, %v444
      %v535 = vsel %vm510, %v506, %v446
      %v536 = vsel %vm510, %v507, %v448
      %v537 = vsel %vm510, %v508, %v450
      %v538 = vsel %vm510, %v509, %v452
      %vm539 = vcmask 97280
      %540 = vst.msk [vmem:[#allocation2] sm:$0xff] %vm539, %v511
      %541 = vst.msk [vmem:[#allocation2 + $0x8] sm:$0xff] %vm539, %v512
      %542 = vst.msk [vmem:[#allocation2 + $0x10] sm:$0xff] %vm539, %v513
      %543 = vst.msk [vmem:[#allocation2 + $0x18] sm:$0xff] %vm539, %v514
      %544 = vst.msk [vmem:[#allocation2 + $0x20] sm:$0xff] %vm539, %v515
      %545 = vst.msk [vmem:[#allocation2 + $0x28] sm:$0xff] %vm539, %v516
      %546 = vst.msk [vmem:[#allocation2 + $0x30] sm:$0xff] %vm539, %v517
      %547 = vst.msk [vmem:[#allocation2 + $0x38] sm:$0xff] %vm539, %v518
      %548 = vst.msk [vmem:[#allocation2 + $0x40] sm:$0xff] %vm539, %v519
      %549 = vst.msk [vmem:[#allocation2 + $0x48] sm:$0xff] %vm539, %v520
      %550 = vst.msk [vmem:[#allocation2 + $0x50] sm:$0xff] %vm539, %v521
      %551 = vst.msk [vmem:[#allocation2 + $0x58] sm:$0xff] %vm539, %v522
      %552 = vst.msk [vmem:[#allocation2 + $0x60] sm:$0xff] %vm539, %v523
      %553 = vst.msk [vmem:[#allocation2 + $0x68] sm:$0xff] %vm539, %v524
      %554 = vst.msk [vmem:[#allocation2 + $0x70] sm:$0xff] %vm539, %v525
      %555 = vst.msk [vmem:[#allocation2 + $0x78] sm:$0xff] %vm539, %v526
      %556 = vst.msk [vmem:[#allocation2 + $0x80] sm:$0xff] %vm539, %v527
      %557 = vst.msk [vmem:[#allocation2 + $0x88] sm:$0xff] %vm539, %v528
      %558 = vst.msk [vmem:[#allocation2 + $0x90] sm:$0xff] %vm539, %v529
      %559 = vst.msk [vmem:[#allocation2 + $0x98] sm:$0xff] %vm539, %v530
      %560 = vst.msk [vmem:[#allocation2 + $0xa0] sm:$0xff] %vm539, %v531
      %561 = vst.msk [vmem:[#allocation2 + $0xa8] sm:$0xff] %vm539, %v532
      %562 = vst.msk [vmem:[#allocation2 + $0xb0] sm:$0xff] %vm539, %v533
      %563 = vst.msk [vmem:[#allocation2 + $0xb8] sm:$0xff] %vm539, %v534
      %564 = vst.msk [vmem:[#allocation2 + $0xc0] sm:$0xff] %vm539, %v535
      %565 = vst.msk [vmem:[#allocation2 + $0xc8] sm:$0xff] %vm539, %v536
      %566 = vst.msk [vmem:[#allocation2 + $0xd0] sm:$0xff] %vm539, %v537
      %567 = vst.msk [vmem:[#allocation2 + $0xd8] sm:$0xff] %vm539, %v538
      %v568 = vld [vmem:[%s206 + $0x1] sm:$0xff]
      %v569 = vld [vmem:[%s206 + $0x9] sm:$0xff]
      %v570 = vld [vmem:[%s206 + $0x19] sm:$0xff]
      %v571 = vld [vmem:[%s206 + $0x21] sm:$0xff]
      %v572 = vld [vmem:[%s206 + $0x31] sm:$0xff]
      %v573 = vld [vmem:[%s206 + $0x39] sm:$0xff]
      %v574 = vld [vmem:[%s206 + $0x49] sm:$0xff]
      %v575 = vld [vmem:[%s206 + $0x51] sm:$0xff]
      %v576 = vld [vmem:[%s206 + $0x61] sm:$0xff]
      %v577 = vld [vmem:[%s206 + $0x69] sm:$0xff]
      %v578 = vld [vmem:[%s206 + $0x79] sm:$0xff]
      %v579 = vld [vmem:[%s206 + $0x81] sm:$0xff]
      %v580 = vld [vmem:[%s206 + $0x91] sm:$0xff]
      %v581 = vld [vmem:[%s206 + $0x99] sm:$0xff]
      %v582 = vld [vmem:[%s206 + $0xa9] sm:$0xff]
      %v583 = vld [vmem:[%s206 + $0xb1] sm:$0xff]
      %v584 = vld [vmem:[%s206 + $0xc1] sm:$0xff]
      %v585 = vld [vmem:[%s206 + $0xc9] sm:$0xff]
      %v586 = vld [vmem:[%s206 + $0xd9] sm:$0xff]
      %v587 = vld [vmem:[%s206 + $0xe1] sm:$0xff]
      %v588 = vld [vmem:[%s206 + $0xf1] sm:$0xff]
      %v589 = vld [vmem:[%s206 + $0xf9] sm:$0xff]
      %v590 = vld [vmem:[%s206 + $0x109] sm:$0xff]
      %v591 = vld [vmem:[%s206 + $0x111] sm:$0xff]
      %v592 = vld [vmem:[%s206 + $0x121] sm:$0xff]
      %v593 = vld [vmem:[%s206 + $0x129] sm:$0xff]
      %v594 = vld [vmem:[%s206 + $0x139] sm:$0xff]
      %v595 = vld [vmem:[%s206 + $0x141] sm:$0xff]
      %v596 = vld [vmem:[%s206 + $0x151] sm:$0xff]
      %v597 = vld [vmem:[%s206 + $0x159] sm:$0xff]
      %v598 = vld [vmem:[%s206 + $0x169] sm:$0xff]
      %v599 = vld [vmem:[%s206 + $0x171] sm:$0xff]
      %628 = vrot.lane.b32.xlu0 %v570, 4
      %v629 = vpop.permute.xlu0 %628
      %630 = vrot.lane.b32.xlu0 %v571, 4
      %v631 = vpop.permute.xlu0 %630
      %632 = vrot.lane.b32.xlu0 %v572, 4
      %v633 = vpop.permute.xlu0 %632
      %634 = vrot.lane.b32.xlu0 %v573, 4
      %v635 = vpop.permute.xlu0 %634
      %636 = vrot.lane.b32.xlu0 %v574, 4
      %v637 = vpop.permute.xlu0 %636
      %638 = vrot.lane.b32.xlu0 %v575, 4
      %v639 = vpop.permute.xlu0 %638
      %640 = vrot.lane.b32.xlu0 %v576, 4
      %v641 = vpop.permute.xlu0 %640
      %642 = vrot.lane.b32.xlu0 %v577, 4
      %v643 = vpop.permute.xlu0 %642
      %644 = vrot.lane.b32.xlu0 %v578, 4
      %v645 = vpop.permute.xlu0 %644
      %646 = vrot.lane.b32.xlu0 %v579, 4
      %v647 = vpop.permute.xlu0 %646
      %648 = vrot.lane.b32.xlu0 %v580, 4
      %v649 = vpop.permute.xlu0 %648
      %650 = vrot.lane.b32.xlu0 %v581, 4
      %v651 = vpop.permute.xlu0 %650
      %652 = vrot.lane.b32.xlu0 %v582, 4
      %v653 = vpop.permute.xlu0 %652
      %654 = vrot.lane.b32.xlu0 %v583, 4
      %v655 = vpop.permute.xlu0 %654
      %656 = vrot.lane.b32.xlu0 %v584, 4
      %v657 = vpop.permute.xlu0 %656
      %658 = vrot.lane.b32.xlu0 %v585, 4
      %v659 = vpop.permute.xlu0 %658
      %660 = vrot.lane.b32.xlu0 %v586, 4
      %v661 = vpop.permute.xlu0 %660
      %662 = vrot.lane.b32.xlu0 %v587, 4
      %v663 = vpop.permute.xlu0 %662
      %664 = vrot.lane.b32.xlu0 %v588, 4
      %v665 = vpop.permute.xlu0 %664
      %666 = vrot.lane.b32.xlu0 %v589, 4
      %v667 = vpop.permute.xlu0 %666
      %668 = vrot.lane.b32.xlu0 %v590, 4
      %v669 = vpop.permute.xlu0 %668
      %670 = vrot.lane.b32.xlu0 %v591, 4
      %v671 = vpop.permute.xlu0 %670
      %672 = vrot.lane.b32.xlu0 %v592, 4
      %v673 = vpop.permute.xlu0 %672
      %674 = vrot.lane.b32.xlu0 %v593, 4
      %v675 = vpop.permute.xlu0 %674
      %676 = vrot.lane.b32.xlu0 %v594, 4
      %v677 = vpop.permute.xlu0 %676
      %678 = vrot.lane.b32.xlu0 %v595, 4
      %v679 = vpop.permute.xlu0 %678
      %680 = vrot.lane.b32.xlu0 %v596, 4
      %v681 = vpop.permute.xlu0 %680
      %682 = vrot.lane.b32.xlu0 %v597, 4
      %v683 = vpop.permute.xlu0 %682
      %714 = vrot.lane.b32.xlu0 %v572, 8
      %v715 = vpop.permute.xlu0 %714
      %716 = vrot.lane.b32.xlu0 %v573, 8
      %v717 = vpop.permute.xlu0 %716
      %718 = vrot.lane.b32.xlu0 %v574, 8
      %v719 = vpop.permute.xlu0 %718
      %720 = vrot.lane.b32.xlu0 %v575, 8
      %v721 = vpop.permute.xlu0 %720
      %722 = vrot.lane.b32.xlu0 %v576, 8
      %v723 = vpop.permute.xlu0 %722
      %724 = vrot.lane.b32.xlu0 %v577, 8
      %v725 = vpop.permute.xlu0 %724
      %726 = vrot.lane.b32.xlu0 %v578, 8
      %v727 = vpop.permute.xlu0 %726
      %728 = vrot.lane.b32.xlu0 %v579, 8
      %v729 = vpop.permute.xlu0 %728
      %730 = vrot.lane.b32.xlu0 %v580, 8
      %v731 = vpop.permute.xlu0 %730
      %732 = vrot.lane.b32.xlu0 %v581, 8
      %v733 = vpop.permute.xlu0 %732
      %734 = vrot.lane.b32.xlu0 %v582, 8
      %v735 = vpop.permute.xlu0 %734
      %736 = vrot.lane.b32.xlu0 %v583, 8
      %v737 = vpop.permute.xlu0 %736
      %738 = vrot.lane.b32.xlu0 %v584, 8
      %v739 = vpop.permute.xlu0 %738
      %740 = vrot.lane.b32.xlu0 %v585, 8
      %v741 = vpop.permute.xlu0 %740
      %742 = vrot.lane.b32.xlu0 %v586, 8
      %v743 = vpop.permute.xlu0 %742
      %744 = vrot.lane.b32.xlu0 %v587, 8
      %v745 = vpop.permute.xlu0 %744
      %746 = vrot.lane.b32.xlu0 %v588, 8
      %v747 = vpop.permute.xlu0 %746
      %748 = vrot.lane.b32.xlu0 %v589, 8
      %v749 = vpop.permute.xlu0 %748
      %750 = vrot.lane.b32.xlu0 %v590, 8
      %v751 = vpop.permute.xlu0 %750
      %752 = vrot.lane.b32.xlu0 %v591, 8
      %v753 = vpop.permute.xlu0 %752
      %754 = vrot.lane.b32.xlu0 %v592, 8
      %v755 = vpop.permute.xlu0 %754
      %756 = vrot.lane.b32.xlu0 %v593, 8
      %v757 = vpop.permute.xlu0 %756
      %758 = vrot.lane.b32.xlu0 %v594, 8
      %v759 = vpop.permute.xlu0 %758
      %760 = vrot.lane.b32.xlu0 %v595, 8
      %v761 = vpop.permute.xlu0 %760
      %762 = vrot.lane.b32.xlu0 %v596, 8
      %v763 = vpop.permute.xlu0 %762
      %764 = vrot.lane.b32.xlu0 %v597, 8
      %v765 = vpop.permute.xlu0 %764
      %766 = vrot.lane.b32.xlu0 %v598, 8
      %v767 = vpop.permute.xlu0 %766
      %768 = vrot.lane.b32.xlu0 %v599, 8
      %v769 = vpop.permute.xlu0 %768
      %v798 = vsel %vm481, %v568, %v629
      %v799 = vsel %vm481, %v569, %v631
      %v800 = vsel %vm481, %v570, %v633
      %v801 = vsel %vm481, %v571, %v635
      %v802 = vsel %vm481, %v572, %v637
      %v803 = vsel %vm481, %v573, %v639
      %v804 = vsel %vm481, %v574, %v641
      %v805 = vsel %vm481, %v575, %v643
      %v806 = vsel %vm481, %v576, %v645
      %v807 = vsel %vm481, %v577, %v647
      %v808 = vsel %vm481, %v578, %v649
      %v809 = vsel %vm481, %v579, %v651
      %v810 = vsel %vm481, %v580, %v653
      %v811 = vsel %vm481, %v581, %v655
      %v812 = vsel %vm481, %v582, %v657
      %v813 = vsel %vm481, %v583, %v659
      %v814 = vsel %vm481, %v584, %v661
      %v815 = vsel %vm481, %v585, %v663
      %v816 = vsel %vm481, %v586, %v665
      %v817 = vsel %vm481, %v587, %v667
      %v818 = vsel %vm481, %v588, %v669
      %v819 = vsel %vm481, %v589, %v671
      %v820 = vsel %vm481, %v590, %v673
      %v821 = vsel %vm481, %v591, %v675
      %v822 = vsel %vm481, %v592, %v677
      %v823 = vsel %vm481, %v593, %v679
      %v824 = vsel %vm481, %v594, %v681
      %v825 = vsel %vm481, %v595, %v683
      %v826 = vsel %vm510, %v798, %v715
      %v827 = vsel %vm510, %v799, %v717
      %v828 = vsel %vm510, %v800, %v719
      %v829 = vsel %vm510, %v801, %v721
      %v830 = vsel %vm510, %v802, %v723
      %v831 = vsel %vm510, %v803, %v725
      %v832 = vsel %vm510, %v804, %v727
      %v833 = vsel %vm510, %v805, %v729
      %v834 = vsel %vm510, %v806, %v731
      %v835 = vsel %vm510, %v807, %v733
      %v836 = vsel %vm510, %v808, %v735
      %v837 = vsel %vm510, %v809, %v737
      %v838 = vsel %vm510, %v810, %v739
      %v839 = vsel %vm510, %v811, %v741
      %v840 = vsel %vm510, %v812, %v743
      %v841 = vsel %vm510, %v813, %v745
      %v842 = vsel %vm510, %v814, %v747
      %v843 = vsel %vm510, %v815, %v749
      %v844 = vsel %vm510, %v816, %v751
      %v845 = vsel %vm510, %v817, %v753
      %v846 = vsel %vm510, %v818, %v755
      %v847 = vsel %vm510, %v819, %v757
      %v848 = vsel %vm510, %v820, %v759
      %v849 = vsel %vm510, %v821, %v761
      %v850 = vsel %vm510, %v822, %v763
      %v851 = vsel %vm510, %v823, %v765
      %v852 = vsel %vm510, %v824, %v767
      %v853 = vsel %vm510, %v825, %v769
      %882 = vrot.lane.b32.xlu0 %v826, 12
      %v883 = vpop.permute.xlu0 %882
      %884 = vrot.lane.b32.xlu0 %v827, 12
      %v885 = vpop.permute.xlu0 %884
      %886 = vrot.lane.b32.xlu0 %v828, 12
      %v887 = vpop.permute.xlu0 %886
      %888 = vrot.lane.b32.xlu0 %v829, 12
      %v889 = vpop.permute.xlu0 %888
      %890 = vrot.lane.b32.xlu0 %v830, 12
      %v891 = vpop.permute.xlu0 %890
      %892 = vrot.lane.b32.xlu0 %v831, 12
      %v893 = vpop.permute.xlu0 %892
      %894 = vrot.lane.b32.xlu0 %v832, 12
      %v895 = vpop.permute.xlu0 %894
      %896 = vrot.lane.b32.xlu0 %v833, 12
      %v897 = vpop.permute.xlu0 %896
      %898 = vrot.lane.b32.xlu0 %v834, 12
      %v899 = vpop.permute.xlu0 %898
      %900 = vrot.lane.b32.xlu0 %v835, 12
      %v901 = vpop.permute.xlu0 %900
      %902 = vrot.lane.b32.xlu0 %v836, 12
      %v903 = vpop.permute.xlu0 %902
      %904 = vrot.lane.b32.xlu0 %v837, 12
      %v905 = vpop.permute.xlu0 %904
      %906 = vrot.lane.b32.xlu0 %v838, 12
      %v907 = vpop.permute.xlu0 %906
      %908 = vrot.lane.b32.xlu0 %v839, 12
      %v909 = vpop.permute.xlu0 %908
      %910 = vrot.lane.b32.xlu0 %v840, 12
      %v911 = vpop.permute.xlu0 %910
      %912 = vrot.lane.b32.xlu0 %v841, 12
      %v913 = vpop.permute.xlu0 %912
      %914 = vrot.lane.b32.xlu0 %v842, 12
      %v915 = vpop.permute.xlu0 %914
      %916 = vrot.lane.b32.xlu0 %v843, 12
      %v917 = vpop.permute.xlu0 %916
      %918 = vrot.lane.b32.xlu0 %v844, 12
      %v919 = vpop.permute.xlu0 %918
      %920 = vrot.lane.b32.xlu0 %v845, 12
      %v921 = vpop.permute.xlu0 %920
      %922 = vrot.lane.b32.xlu0 %v846, 12
      %v923 = vpop.permute.xlu0 %922
      %924 = vrot.lane.b32.xlu0 %v847, 12
      %v925 = vpop.permute.xlu0 %924
      %926 = vrot.lane.b32.xlu0 %v848, 12
      %v927 = vpop.permute.xlu0 %926
      %928 = vrot.lane.b32.xlu0 %v849, 12
      %v929 = vpop.permute.xlu0 %928
      %930 = vrot.lane.b32.xlu0 %v850, 12
      %v931 = vpop.permute.xlu0 %930
      %932 = vrot.lane.b32.xlu0 %v851, 12
      %v933 = vpop.permute.xlu0 %932
      %934 = vrot.lane.b32.xlu0 %v852, 12
      %v935 = vpop.permute.xlu0 %934
      %936 = vrot.lane.b32.xlu0 %v853, 12
      %v937 = vpop.permute.xlu0 %936
      %vm966 = vcmask 195680
      %967 = vst.msk [vmem:[#allocation2] sm:$0xff] %vm966, %v883
      %968 = vst.msk [vmem:[#allocation2 + $0x8] sm:$0xff] %vm966, %v885
      %969 = vst.msk [vmem:[#allocation2 + $0x10] sm:$0xff] %vm966, %v887
      %970 = vst.msk [vmem:[#allocation2 + $0x18] sm:$0xff] %vm966, %v889
      %971 = vst.msk [vmem:[#allocation2 + $0x20] sm:$0xff] %vm966, %v891
      %972 = vst.msk [vmem:[#allocation2 + $0x28] sm:$0xff] %vm966, %v893
      %973 = vst.msk [vmem:[#allocation2 + $0x30] sm:$0xff] %vm966, %v895
      %974 = vst.msk [vmem:[#allocation2 + $0x38] sm:$0xff] %vm966, %v897
      %975 = vst.msk [vmem:[#allocation2 + $0x40] sm:$0xff] %vm966, %v899
      %976 = vst.msk [vmem:[#allocation2 + $0x48] sm:$0xff] %vm966, %v901
      %977 = vst.msk [vmem:[#allocation2 + $0x50] sm:$0xff] %vm966, %v903
      %978 = vst.msk [vmem:[#allocation2 + $0x58] sm:$0xff] %vm966, %v905
      %979 = vst.msk [vmem:[#allocation2 + $0x60] sm:$0xff] %vm966, %v907
      %980 = vst.msk [vmem:[#allocation2 + $0x68] sm:$0xff] %vm966, %v909
      %981 = vst.msk [vmem:[#allocation2 + $0x70] sm:$0xff] %vm966, %v911
      %982 = vst.msk [vmem:[#allocation2 + $0x78] sm:$0xff] %vm966, %v913
      %983 = vst.msk [vmem:[#allocation2 + $0x80] sm:$0xff] %vm966, %v915
      %984 = vst.msk [vmem:[#allocation2 + $0x88] sm:$0xff] %vm966, %v917
      %985 = vst.msk [vmem:[#allocation2 + $0x90] sm:$0xff] %vm966, %v919
      %986 = vst.msk [vmem:[#allocation2 + $0x98] sm:$0xff] %vm966, %v921
      %987 = vst.msk [vmem:[#allocation2 + $0xa0] sm:$0xff] %vm966, %v923
      %988 = vst.msk [vmem:[#allocation2 + $0xa8] sm:$0xff] %vm966, %v925
      %989 = vst.msk [vmem:[#allocation2 + $0xb0] sm:$0xff] %vm966, %v927
      %990 = vst.msk [vmem:[#allocation2 + $0xb8] sm:$0xff] %vm966, %v929
      %991 = vst.msk [vmem:[#allocation2 + $0xc0] sm:$0xff] %vm966, %v931
      %992 = vst.msk [vmem:[#allocation2 + $0xc8] sm:$0xff] %vm966, %v933
      %993 = vst.msk [vmem:[#allocation2 + $0xd0] sm:$0xff] %vm966, %v935
      %994 = vst.msk [vmem:[#allocation2 + $0xd8] sm:$0xff] %vm966, %v937
      %v995 = vld [vmem:[%s206 + $0x2] sm:$0xff]
      %v996 = vld [vmem:[%s206 + $0xa] sm:$0xff]
      %v997 = vld [vmem:[%s206 + $0x1a] sm:$0xff]
      %v998 = vld [vmem:[%s206 + $0x22] sm:$0xff]
      %v999 = vld [vmem:[%s206 + $0x32] sm:$0xff]
      %v1000 = vld [vmem:[%s206 + $0x3a] sm:$0xff]
      %v1001 = vld [vmem:[%s206 + $0x4a] sm:$0xff]
      %v1002 = vld [vmem:[%s206 + $0x52] sm:$0xff]
      %v1003 = vld [vmem:[%s206 + $0x62] sm:$0xff]
      %v1004 = vld [vmem:[%s206 + $0x6a] sm:$0xff]
      %v1005 = vld [vmem:[%s206 + $0x7a] sm:$0xff]
      %v1006 = vld [vmem:[%s206 + $0x82] sm:$0xff]
      %v1007 = vld [vmem:[%s206 + $0x92] sm:$0xff]
      %v1008 = vld [vmem:[%s206 + $0x9a] sm:$0xff]
      %v1009 = vld [vmem:[%s206 + $0xaa] sm:$0xff]
      %v1010 = vld [vmem:[%s206 + $0xb2] sm:$0xff]
      %v1011 = vld [vmem:[%s206 + $0xc2] sm:$0xff]
      %v1012 = vld [vmem:[%s206 + $0xca] sm:$0xff]
      %v1013 = vld [vmem:[%s206 + $0xda] sm:$0xff]
      %v1014 = vld [vmem:[%s206 + $0xe2] sm:$0xff]
      %v1015 = vld [vmem:[%s206 + $0xf2] sm:$0xff]
      %v1016 = vld [vmem:[%s206 + $0xfa] sm:$0xff]
      %v1017 = vld [vmem:[%s206 + $0x10a] sm:$0xff]
      %v1018 = vld [vmem:[%s206 + $0x112] sm:$0xff]
      %v1019 = vld [vmem:[%s206 + $0x122] sm:$0xff]
      %v1020 = vld [vmem:[%s206 + $0x12a] sm:$0xff]
      %v1021 = vld [vmem:[%s206 + $0x13a] sm:$0xff]
      %v1022 = vld [vmem:[%s206 + $0x142] sm:$0xff]
      %v1023 = vld [vmem:[%s206 + $0x152] sm:$0xff]
      %v1024 = vld [vmem:[%s206 + $0x15a] sm:$0xff]
      %v1025 = vld [vmem:[%s206 + $0x16a] sm:$0xff]
      %v1026 = vld [vmem:[%s206 + $0x172] sm:$0xff]
      %1055 = vrot.lane.b32.xlu0 %v997, 4
      %v1056 = vpop.permute.xlu0 %1055
      %1057 = vrot.lane.b32.xlu0 %v998, 4
      %v1058 = vpop.permute.xlu0 %1057
      %1059 = vrot.lane.b32.xlu0 %v999, 4
      %v1060 = vpop.permute.xlu0 %1059
      %1061 = vrot.lane.b32.xlu0 %v1000, 4
      %v1062 = vpop.permute.xlu0 %1061
      %1063 = vrot.lane.b32.xlu0 %v1001, 4
      %v1064 = vpop.permute.xlu0 %1063
      %1065 = vrot.lane.b32.xlu0 %v1002, 4
      %v1066 = vpop.permute.xlu0 %1065
      %1067 = vrot.lane.b32.xlu0 %v1003, 4
      %v1068 = vpop.permute.xlu0 %1067
      %1069 = vrot.lane.b32.xlu0 %v1004, 4
      %v1070 = vpop.permute.xlu0 %1069
      %1071 = vrot.lane.b32.xlu0 %v1005, 4
      %v1072 = vpop.permute.xlu0 %1071
      %1073 = vrot.lane.b32.xlu0 %v1006, 4
      %v1074 = vpop.permute.xlu0 %1073
      %1075 = vrot.lane.b32.xlu0 %v1007, 4
      %v1076 = vpop.permute.xlu0 %1075
      %1077 = vrot.lane.b32.xlu0 %v1008, 4
      %v1078 = vpop.permute.xlu0 %1077
      %1079 = vrot.lane.b32.xlu0 %v1009, 4
      %v1080 = vpop.permute.xlu0 %1079
      %1081 = vrot.lane.b32.xlu0 %v1010, 4
      %v1082 = vpop.permute.xlu0 %1081
      %1083 = vrot.lane.b32.xlu0 %v1011, 4
      %v1084 = vpop.permute.xlu0 %1083
      %1085 = vrot.lane.b32.xlu0 %v1012, 4
      %v1086 = vpop.permute.xlu0 %1085
      %1087 = vrot.lane.b32.xlu0 %v1013, 4
      %v1088 = vpop.permute.xlu0 %1087
      %1089 = vrot.lane.b32.xlu0 %v1014, 4
      %v1090 = vpop.permute.xlu0 %1089
      %1091 = vrot.lane.b32.xlu0 %v1015, 4
      %v1092 = vpop.permute.xlu0 %1091
      %1093 = vrot.lane.b32.xlu0 %v1016, 4
      %v1094 = vpop.permute.xlu0 %1093
      %1095 = vrot.lane.b32.xlu0 %v1017, 4
      %v1096 = vpop.permute.xlu0 %1095
      %1097 = vrot.lane.b32.xlu0 %v1018, 4
      %v1098 = vpop.permute.xlu0 %1097
      %1099 = vrot.lane.b32.xlu0 %v1019, 4
      %v1100 = vpop.permute.xlu0 %1099
      %1101 = vrot.lane.b32.xlu0 %v1020, 4
      %v1102 = vpop.permute.xlu0 %1101
      %1103 = vrot.lane.b32.xlu0 %v1021, 4
      %v1104 = vpop.permute.xlu0 %1103
      %1105 = vrot.lane.b32.xlu0 %v1022, 4
      %v1106 = vpop.permute.xlu0 %1105
      %1107 = vrot.lane.b32.xlu0 %v1023, 4
      %v1108 = vpop.permute.xlu0 %1107
      %1109 = vrot.lane.b32.xlu0 %v1024, 4
      %v1110 = vpop.permute.xlu0 %1109
      %1141 = vrot.lane.b32.xlu0 %v999, 8
      %v1142 = vpop.permute.xlu0 %1141
      %1143 = vrot.lane.b32.xlu0 %v1000, 8
      %v1144 = vpop.permute.xlu0 %1143
      %1145 = vrot.lane.b32.xlu0 %v1001, 8
      %v1146 = vpop.permute.xlu0 %1145
      %1147 = vrot.lane.b32.xlu0 %v1002, 8
      %v1148 = vpop.permute.xlu0 %1147
      %1149 = vrot.lane.b32.xlu0 %v1003, 8
      %v1150 = vpop.permute.xlu0 %1149
      %1151 = vrot.lane.b32.xlu0 %v1004, 8
      %v1152 = vpop.permute.xlu0 %1151
      %1153 = vrot.lane.b32.xlu0 %v1005, 8
      %v1154 = vpop.permute.xlu0 %1153
      %1155 = vrot.lane.b32.xlu0 %v1006, 8
      %v1156 = vpop.permute.xlu0 %1155
      %1157 = vrot.lane.b32.xlu0 %v1007, 8
      %v1158 = vpop.permute.xlu0 %1157
      %1159 = vrot.lane.b32.xlu0 %v1008, 8
      %v1160 = vpop.permute.xlu0 %1159
      %1161 = vrot.lane.b32.xlu0 %v1009, 8
      %v1162 = vpop.permute.xlu0 %1161
      %1163 = vrot.lane.b32.xlu0 %v1010, 8
      %v1164 = vpop.permute.xlu0 %1163
      %1165 = vrot.lane.b32.xlu0 %v1011, 8
      %v1166 = vpop.permute.xlu0 %1165
      %1167 = vrot.lane.b32.xlu0 %v1012, 8
      %v1168 = vpop.permute.xlu0 %1167
      %1169 = vrot.lane.b32.xlu0 %v1013, 8
      %v1170 = vpop.permute.xlu0 %1169
      %1171 = vrot.lane.b32.xlu0 %v1014, 8
      %v1172 = vpop.permute.xlu0 %1171
      %1173 = vrot.lane.b32.xlu0 %v1015, 8
      %v1174 = vpop.permute.xlu0 %1173
      %1175 = vrot.lane.b32.xlu0 %v1016, 8
      %v1176 = vpop.permute.xlu0 %1175
      %1177 = vrot.lane.b32.xlu0 %v1017, 8
      %v1178 = vpop.permute.xlu0 %1177
      %1179 = vrot.lane.b32.xlu0 %v1018, 8
      %v1180 = vpop.permute.xlu0 %1179
      %1181 = vrot.lane.b32.xlu0 %v1019, 8
      %v1182 = vpop.permute.xlu0 %1181
      %1183 = vrot.lane.b32.xlu0 %v1020, 8
      %v1184 = vpop.permute.xlu0 %1183
      %1185 = vrot.lane.b32.xlu0 %v1021, 8
      %v1186 = vpop.permute.xlu0 %1185
      %1187 = vrot.lane.b32.xlu0 %v1022, 8
      %v1188 = vpop.permute.xlu0 %1187
      %1189 = vrot.lane.b32.xlu0 %v1023, 8
      %v1190 = vpop.permute.xlu0 %1189
      %1191 = vrot.lane.b32.xlu0 %v1024, 8
      %v1192 = vpop.permute.xlu0 %1191
      %1193 = vrot.lane.b32.xlu0 %v1025, 8
      %v1194 = vpop.permute.xlu0 %1193
      %1195 = vrot.lane.b32.xlu0 %v1026, 8
      %v1196 = vpop.permute.xlu0 %1195
      %v1225 = vsel %vm481, %v995, %v1056
      %v1226 = vsel %vm481, %v996, %v1058
      %v1227 = vsel %vm481, %v997, %v1060
      %v1228 = vsel %vm481, %v998, %v1062
      %v1229 = vsel %vm481, %v999, %v1064
      %v1230 = vsel %vm481, %v1000, %v1066
      %v1231 = vsel %vm481, %v1001, %v1068
      %v1232 = vsel %vm481, %v1002, %v1070
      %v1233 = vsel %vm481, %v1003, %v1072
      %v1234 = vsel %vm481, %v1004, %v1074
      %v1235 = vsel %vm481, %v1005, %v1076
      %v1236 = vsel %vm481, %v1006, %v1078
      %v1237 = vsel %vm481, %v1007, %v1080
      %v1238 = vsel %vm481, %v1008, %v1082
      %v1239 = vsel %vm481, %v1009, %v1084
      %v1240 = vsel %vm481, %v1010, %v1086
      %v1241 = vsel %vm481, %v1011, %v1088
      %v1242 = vsel %vm481, %v1012, %v1090
      %v1243 = vsel %vm481, %v1013, %v1092
      %v1244 = vsel %vm481, %v1014, %v1094
      %v1245 = vsel %vm481, %v1015, %v1096
      %v1246 = vsel %vm481, %v1016, %v1098
      %v1247 = vsel %vm481, %v1017, %v1100
      %v1248 = vsel %vm481, %v1018, %v1102
      %v1249 = vsel %vm481, %v1019, %v1104
      %v1250 = vsel %vm481, %v1020, %v1106
      %v1251 = vsel %vm481, %v1021, %v1108
      %v1252 = vsel %vm481, %v1022, %v1110
      %v1253 = vsel %vm510, %v1225, %v1142
      %v1254 = vsel %vm510, %v1226, %v1144
      %v1255 = vsel %vm510, %v1227, %v1146
      %v1256 = vsel %vm510, %v1228, %v1148
      %v1257 = vsel %vm510, %v1229, %v1150
      %v1258 = vsel %vm510, %v1230, %v1152
      %v1259 = vsel %vm510, %v1231, %v1154
      %v1260 = vsel %vm510, %v1232, %v1156
      %v1261 = vsel %vm510, %v1233, %v1158
      %v1262 = vsel %vm510, %v1234, %v1160
      %v1263 = vsel %vm510, %v1235, %v1162
      %v1264 = vsel %vm510, %v1236, %v1164
      %v1265 = vsel %vm510, %v1237, %v1166
      %v1266 = vsel %vm510, %v1238, %v1168
      %v1267 = vsel %vm510, %v1239, %v1170
      %v1268 = vsel %vm510, %v1240, %v1172
      %v1269 = vsel %vm510, %v1241, %v1174
      %v1270 = vsel %vm510, %v1242, %v1176
      %v1271 = vsel %vm510, %v1243, %v1178
      %v1272 = vsel %vm510, %v1244, %v1180
      %v1273 = vsel %vm510, %v1245, %v1182
      %v1274 = vsel %vm510, %v1246, %v1184
      %v1275 = vsel %vm510, %v1247, %v1186
      %v1276 = vsel %vm510, %v1248, %v1188
      %v1277 = vsel %vm510, %v1249, %v1190
      %v1278 = vsel %vm510, %v1250, %v1192
      %v1279 = vsel %vm510, %v1251, %v1194
      %v1280 = vsel %vm510, %v1252, %v1196
      %1309 = vrot.lane.b32.xlu0 %v1253, 24
      %v1310 = vpop.permute.xlu0 %1309
      %1311 = vrot.lane.b32.xlu0 %v1254, 24
      %v1312 = vpop.permute.xlu0 %1311
      %1313 = vrot.lane.b32.xlu0 %v1255, 24
      %v1314 = vpop.permute.xlu0 %1313
      %1315 = vrot.lane.b32.xlu0 %v1256, 24
      %v1316 = vpop.permute.xlu0 %1315
      %1317 = vrot.lane.b32.xlu0 %v1257, 24
      %v1318 = vpop.permute.xlu0 %1317
      %1319 = vrot.lane.b32.xlu0 %v1258, 24
      %v1320 = vpop.permute.xlu0 %1319
      %1321 = vrot.lane.b32.xlu0 %v1259, 24
      %v1322 = vpop.permute.xlu0 %1321
      %1323 = vrot.lane.b32.xlu0 %v1260, 24
      %v1324 = vpop.permute.xlu0 %1323
      %1325 = vrot.lane.b32.xlu0 %v1261, 24
      %v1326 = vpop.permute.xlu0 %1325
      %1327 = vrot.lane.b32.xlu0 %v1262, 24
      %v1328 = vpop.permute.xlu0 %1327
      %1329 = vrot.lane.b32.xlu0 %v1263, 24
      %v1330 = vpop.permute.xlu0 %1329
      %1331 = vrot.lane.b32.xlu0 %v1264, 24
      %v1332 = vpop.permute.xlu0 %1331
      %1333 = vrot.lane.b32.xlu0 %v1265, 24
      %v1334 = vpop.permute.xlu0 %1333
      %1335 = vrot.lane.b32.xlu0 %v1266, 24
      %v1336 = vpop.permute.xlu0 %1335
      %1337 = vrot.lane.b32.xlu0 %v1267, 24
      %v1338 = vpop.permute.xlu0 %1337
      %1339 = vrot.lane.b32.xlu0 %v1268, 24
      %v1340 = vpop.permute.xlu0 %1339
      %1341 = vrot.lane.b32.xlu0 %v1269, 24
      %v1342 = vpop.permute.xlu0 %1341
      %1343 = vrot.lane.b32.xlu0 %v1270, 24
      %v1344 = vpop.permute.xlu0 %1343
      %1345 = vrot.lane.b32.xlu0 %v1271, 24
      %v1346 = vpop.permute.xlu0 %1345
      %1347 = vrot.lane.b32.xlu0 %v1272, 24
      %v1348 = vpop.permute.xlu0 %1347
      %1349 = vrot.lane.b32.xlu0 %v1273, 24
      %v1350 = vpop.permute.xlu0 %1349
      %1351 = vrot.lane.b32.xlu0 %v1274, 24
      %v1352 = vpop.permute.xlu0 %1351
      %1353 = vrot.lane.b32.xlu0 %v1275, 24
      %v1354 = vpop.permute.xlu0 %1353
      %1355 = vrot.lane.b32.xlu0 %v1276, 24
      %v1356 = vpop.permute.xlu0 %1355
      %1357 = vrot.lane.b32.xlu0 %v1277, 24
      %v1358 = vpop.permute.xlu0 %1357
      %1359 = vrot.lane.b32.xlu0 %v1278, 24
      %v1360 = vpop.permute.xlu0 %1359
      %1361 = vrot.lane.b32.xlu0 %v1279, 24
      %v1362 = vpop.permute.xlu0 %1361
      %1363 = vrot.lane.b32.xlu0 %v1280, 24
      %v1364 = vpop.permute.xlu0 %1363
      %vm1393 = vcmask 294080
      %1394 = vst.msk [vmem:[#allocation2] sm:$0xff] %vm1393, %v1310
      %1395 = vst.msk [vmem:[#allocation2 + $0x8] sm:$0xff] %vm1393, %v1312
      %1396 = vst.msk [vmem:[#allocation2 + $0x10] sm:$0xff] %vm1393, %v1314
      %1397 = vst.msk [vmem:[#allocation2 + $0x18] sm:$0xff] %vm1393, %v1316
      %1398 = vst.msk [vmem:[#allocation2 + $0x20] sm:$0xff] %vm1393, %v1318
      %1399 = vst.msk [vmem:[#allocation2 + $0x28] sm:$0xff] %vm1393, %v1320
      %1400 = vst.msk [vmem:[#allocation2 + $0x30] sm:$0xff] %vm1393, %v1322
      %1401 = vst.msk [vmem:[#allocation2 + $0x38] sm:$0xff] %vm1393, %v1324
      %1402 = vst.msk [vmem:[#allocation2 + $0x40] sm:$0xff] %vm1393, %v1326
      %1403 = vst.msk [vmem:[#allocation2 + $0x48] sm:$0xff] %vm1393, %v1328
      %1404 = vst.msk [vmem:[#allocation2 + $0x50] sm:$0xff] %vm1393, %v1330
      %1405 = vst.msk [vmem:[#allocation2 + $0x58] sm:$0xff] %vm1393, %v1332
      %1406 = vst.msk [vmem:[#allocation2 + $0x60] sm:$0xff] %vm1393, %v1334
      %1407 = vst.msk [vmem:[#allocation2 + $0x68] sm:$0xff] %vm1393, %v1336
      %1408 = vst.msk [vmem:[#allocation2 + $0x70] sm:$0xff] %vm1393, %v1338
      %1409 = vst.msk [vmem:[#allocation2 + $0x78] sm:$0xff] %vm1393, %v1340
      %1410 = vst.msk [vmem:[#allocation2 + $0x80] sm:$0xff] %vm1393, %v1342
      %1411 = vst.msk [vmem:[#allocation2 + $0x88] sm:$0xff] %vm1393, %v1344
      %1412 = vst.msk [vmem:[#allocation2 + $0x90] sm:$0xff] %vm1393, %v1346
      %1413 = vst.msk [vmem:[#allocation2 + $0x98] sm:$0xff] %vm1393, %v1348
      %1414 = vst.msk [vmem:[#allocation2 + $0xa0] sm:$0xff] %vm1393, %v1350
      %1415 = vst.msk [vmem:[#allocation2 + $0xa8] sm:$0xff] %vm1393, %v1352
      %1416 = vst.msk [vmem:[#allocation2 + $0xb0] sm:$0xff] %vm1393, %v1354
      %1417 = vst.msk [vmem:[#allocation2 + $0xb8] sm:$0xff] %vm1393, %v1356
      %1418 = vst.msk [vmem:[#allocation2 + $0xc0] sm:$0xff] %vm1393, %v1358
      %1419 = vst.msk [vmem:[#allocation2 + $0xc8] sm:$0xff] %vm1393, %v1360
      %1420 = vst.msk [vmem:[#allocation2 + $0xd0] sm:$0xff] %vm1393, %v1362
      %1421 = vst.msk [vmem:[#allocation2 + $0xd8] sm:$0xff] %vm1393, %v1364
      %v1422 = vld [vmem:[#allocation2] sm:$0xff]
      %v1423 = vld [vmem:[#allocation2 + $0x8] sm:$0xff]
      %v1424 = vld [vmem:[#allocation2 + $0x10] sm:$0xff]
      %v1425 = vld [vmem:[#allocation2 + $0x18] sm:$0xff]
      %v1426 = vld [vmem:[#allocation2 + $0x20] sm:$0xff]
      %v1427 = vld [vmem:[#allocation2 + $0x28] sm:$0xff]
      %v1428 = vld [vmem:[#allocation2 + $0x30] sm:$0xff]
      %v1429 = vld [vmem:[#allocation2 + $0x38] sm:$0xff]
      %v1430 = vld [vmem:[#allocation2 + $0x40] sm:$0xff]
      %v1431 = vld [vmem:[#allocation2 + $0x48] sm:$0xff]
      %v1432 = vld [vmem:[#allocation2 + $0x50] sm:$0xff]
      %v1433 = vld [vmem:[#allocation2 + $0x58] sm:$0xff]
      %v1434 = vld [vmem:[#allocation2 + $0x60] sm:$0xff]
      %v1435 = vld [vmem:[#allocation2 + $0x68] sm:$0xff]
      %v1436 = vld [vmem:[#allocation2 + $0x70] sm:$0xff]
      %v1437 = vld [vmem:[#allocation2 + $0x78] sm:$0xff]
      %v1438 = vld [vmem:[#allocation2 + $0x80] sm:$0xff]
      %v1439 = vld [vmem:[#allocation2 + $0x88] sm:$0xff]
      %v1440 = vld [vmem:[#allocation2 + $0x90] sm:$0xff]
      %v1441 = vld [vmem:[#allocation2 + $0x98] sm:$0xff]
      %v1442 = vld [vmem:[#allocation2 + $0xa0] sm:$0xff]
      %v1443 = vld [vmem:[#allocation2 + $0xa8] sm:$0xff]
      %v1444 = vld [vmem:[#allocation2 + $0xb0] sm:$0xff]
      %v1445 = vld [vmem:[#allocation2 + $0xb8] sm:$0xff]
      %v1446 = vld [vmem:[#allocation2 + $0xc0] sm:$0xff]
      %v1447 = vld [vmem:[#allocation2 + $0xc8] sm:$0xff]
      %v1448 = vld [vmem:[#allocation2 + $0xd0] sm:$0xff]
      %v1449 = vld [vmem:[#allocation2 + $0xd8] sm:$0xff]
      %v1450 = vld [vmem:[%s210] sm:$0xff]
      %v1451 = vld [vmem:[%s210 + $0x8] sm:$0xff]
      %v1452 = vld [vmem:[%s210 + $0x10] sm:$0xff]
      %v1453 = vld [vmem:[%s210 + $0x18] sm:$0xff]
      %v1454 = vld [vmem:[%s210 + $0x20] sm:$0xff]
      %v1455 = vld [vmem:[%s210 + $0x28] sm:$0xff]
      %v1456 = vld [vmem:[%s210 + $0x30] sm:$0xff]
      %v1457 = vld [vmem:[%s210 + $0x38] sm:$0xff]
      %v1458 = vld [vmem:[%s210 + $0x40] sm:$0xff]
      %v1459 = vld [vmem:[%s210 + $0x48] sm:$0xff]
      %v1460 = vld [vmem:[%s210 + $0x50] sm:$0xff]
      %v1461 = vld [vmem:[%s210 + $0x58] sm:$0xff]
      %v1462 = vld [vmem:[%s210 + $0x60] sm:$0xff]
      %v1463 = vld [vmem:[%s210 + $0x68] sm:$0xff]
      %v1464 = vld [vmem:[%s210 + $0x70] sm:$0xff]
      %v1465 = vld [vmem:[%s210 + $0x78] sm:$0xff]
      %v1466 = vld [vmem:[%s213] sm:$0x1]
      %v1468 = vlaneseq
      %v1469 = vshrl.u32 %v1468, 7
      %v1470 = vsub.s32 0, %v1469
      %v1471 = vrot.slane %v1466, %v1470
      %1473 = vmatprep.subr.mxu0 0.0
      %1474 = vmatpush1.msra.mxu0 %v1465
      %1475 = vmatprep.subr.mxu0 0.0
      %1476 = vmatpush1.msra.mxu0 %v1464
      %1477 = vmatprep.subr.mxu0 0.0
      %1478 = vmatpush1.msra.mxu0 %v1463
      %1479 = vmatprep.subr.mxu0 0.0
      %1480 = vmatpush1.msra.mxu0 %v1462
      %1481 = vmatprep.subr.mxu0 0.0
      %1482 = vmatpush1.msra.mxu0 %v1461
      %1483 = vmatprep.subr.mxu0 0.0
      %1484 = vmatpush1.msra.mxu0 %v1460
      %1485 = vmatprep.subr.mxu0 0.0
      %1486 = vmatpush1.msra.mxu0 %v1459
      %1487 = vmatprep.subr.mxu0 0.0
      %1488 = vmatpush1.msra.mxu0 %v1458
      %1489 = vmatprep.subr.mxu0 0.0
      %1490 = vmatpush1.msra.mxu0 %v1457
      %1491 = vmatprep.subr.mxu0 0.0
      %1492 = vmatpush1.msra.mxu0 %v1456
      %1493 = vmatprep.subr.mxu0 0.0
      %1494 = vmatpush1.msra.mxu0 %v1455
      %1495 = vmatprep.subr.mxu0 0.0
      %1496 = vmatpush1.msra.mxu0 %v1454
      %1497 = vmatprep.subr.mxu0 0.0
      %1498 = vmatpush1.msra.mxu0 %v1453
      %1499 = vmatprep.subr.mxu0 0.0
      %1500 = vmatpush1.msra.mxu0 %v1452
      %1501 = vmatprep.subr.mxu0 0.0
      %1502 = vmatpush1.msra.mxu0 %v1451
      %1503 = vmatprep.subr.mxu0 0.0
      %1504 = vmatpush1.msra.mxu0 %v1450
      %1505 = vmatprep.subr.mxu0 0.0
      %1506 = vmatpush2.msra.mxu0 0.0
      %1507 = vmatprep.subr.mxu0 0.0
      %1508 = vmatpush2.msra.mxu0 0.0
      %1509 = vmatprep.subr.mxu0 0.0
      %1510 = vmatpush2.msra.mxu0 0.0
      %1511 = vmatprep.subr.mxu0 0.0
      %1512 = vmatpush2.msra.mxu0 0.0
      %1513 = vmatprep.subr.mxu0 0.0
      %1514 = vmatpush2.msra.mxu0 0.0
      %1515 = vmatprep.subr.mxu0 0.0
      %1516 = vmatpush2.msra.mxu0 0.0
      %1517 = vmatprep.subr.mxu0 0.0
      %1518 = vmatpush2.msra.mxu0 0.0
      %1519 = vmatprep.subr.mxu0 0.0
      %1520 = vmatpush2.msra.mxu0 0.0
      %1521 = vmatprep.subr.mxu0 0.0
      %1522 = vmatpush2.msra.mxu0 0.0
      %1523 = vmatprep.subr.mxu0 0.0
      %1524 = vmatpush2.msra.mxu0 0.0
      %1525 = vmatprep.subr.mxu0 0.0
      %1526 = vmatpush2.msra.mxu0 0.0
      %1527 = vmatprep.subr.mxu0 0.0
      %1528 = vmatpush2.msra.mxu0 0.0
      %1529 = vmatprep.subr.mxu0 0.0
      %1530 = vmatpush2.msra.mxu0 0.0
      %1531 = vmatprep.subr.mxu0 0.0
      %1532 = vmatpush2.msra.mxu0 0.0
      %1533 = vmatprep.subr.mxu0 0.0
      %1534 = vmatpush2.msra.mxu0 0.0
      %1535 = vmatprep.subr.mxu0 0.0
      %1536 = vmatpush2.msra.mxu0 0.0
      %1537 = vmatprep.mubr.f32.mxu0 0.0
      %1538 = vmatmul.mubr.f32.gmra.mxu0 %v1422
      %v1539 = vpop.f32.mrf.mxu0
      %v1540 = vadd.f32 %v1471, %v1539
      %v1541 = vpop.f32.mrf.mxu0
      %1542 = vmatprep.mubr.f32.mxu0 0.0
      %1543 = vmatmul.mubr.f32.gmra.mxu0 %v1423
      %v1544 = vpop.f32.mrf.mxu0
      %v1545 = vadd.f32 %v1471, %v1544
      %v1546 = vpop.f32.mrf.mxu0
      %1547 = vmatprep.mubr.f32.mxu0 0.0
      %1548 = vmatmul.mubr.f32.gmra.mxu0 %v1424
      %v1549 = vpop.f32.mrf.mxu0
      %v1550 = vadd.f32 %v1471, %v1549
      %v1551 = vpop.f32.mrf.mxu0
      %1552 = vmatprep.mubr.f32.mxu0 0.0
      %1553 = vmatmul.mubr.f32.gmra.mxu0 %v1425
      %v1554 = vpop.f32.mrf.mxu0
      %v1555 = vadd.f32 %v1471, %v1554
      %v1556 = vpop.f32.mrf.mxu0
      %1557 = vmatprep.mubr.f32.mxu0 0.0
      %1558 = vmatmul.mubr.f32.gmra.mxu0 %v1426
      %v1559 = vpop.f32.mrf.mxu0
      %v1560 = vadd.f32 %v1471, %v1559
      %v1561 = vpop.f32.mrf.mxu0
      %1562 = vmatprep.mubr.f32.mxu0 0.0
      %1563 = vmatmul.mubr.f32.gmra.mxu0 %v1427
      %v1564 = vpop.f32.mrf.mxu0
      %v1565 = vadd.f32 %v1471, %v1564
      %v1566 = vpop.f32.mrf.mxu0
      %1567 = vmatprep.mubr.f32.mxu0 0.0
      %1568 = vmatmul.mubr.f32.gmra.mxu0 %v1428
      %v1569 = vpop.f32.mrf.mxu0
      %v1570 = vadd.f32 %v1471, %v1569
      %v1571 = vpop.f32.mrf.mxu0
      %1572 = vmatprep.mubr.f32.mxu0 0.0
      %1573 = vmatmul.mubr.f32.gmra.mxu0 %v1429
      %v1574 = vpop.f32.mrf.mxu0
      %v1575 = vadd.f32 %v1471, %v1574
      %v1576 = vpop.f32.mrf.mxu0
      %1577 = vmatprep.mubr.f32.mxu0 0.0
      %1578 = vmatmul.mubr.f32.gmra.mxu0 %v1430
      %v1579 = vpop.f32.mrf.mxu0
      %v1580 = vadd.f32 %v1471, %v1579
      %v1581 = vpop.f32.mrf.mxu0
      %1582 = vmatprep.mubr.f32.mxu0 0.0
      %1583 = vmatmul.mubr.f32.gmra.mxu0 %v1431
      %v1584 = vpop.f32.mrf.mxu0
      %v1585 = vadd.f32 %v1471, %v1584
      %v1586 = vpop.f32.mrf.mxu0
      %1587 = vmatprep.mubr.f32.mxu0 0.0
      %1588 = vmatmul.mubr.f32.gmra.mxu0 %v1432
      %v1589 = vpop.f32.mrf.mxu0
      %v1590 = vadd.f32 %v1471, %v1589
      %v1591 = vpop.f32.mrf.mxu0
      %1592 = vmatprep.mubr.f32.mxu0 0.0
      %1593 = vmatmul.mubr.f32.gmra.mxu0 %v1433
      %v1594 = vpop.f32.mrf.mxu0
      %v1595 = vadd.f32 %v1471, %v1594
      %v1596 = vpop.f32.mrf.mxu0
      %1597 = vmatprep.mubr.f32.mxu0 0.0
      %1598 = vmatmul.mubr.f32.gmra.mxu0 %v1434
      %v1599 = vpop.f32.mrf.mxu0
      %v1600 = vadd.f32 %v1471, %v1599
      %v1601 = vpop.f32.mrf.mxu0
      %1602 = vmatprep.mubr.f32.mxu0 0.0
      %1603 = vmatmul.mubr.f32.gmra.mxu0 %v1435
      %v1604 = vpop.f32.mrf.mxu0
      %v1605 = vadd.f32 %v1471, %v1604
      %v1606 = vpop.f32.mrf.mxu0
      %1607 = vmatprep.mubr.f32.mxu0 0.0
      %1608 = vmatmul.mubr.f32.gmra.mxu0 %v1436
      %v1609 = vpop.f32.mrf.mxu0
      %v1610 = vadd.f32 %v1471, %v1609
      %v1611 = vpop.f32.mrf.mxu0
      %1612 = vmatprep.mubr.f32.mxu0 0.0
      %1613 = vmatmul.mubr.f32.gmra.mxu0 %v1437
      %v1614 = vpop.f32.mrf.mxu0
      %v1615 = vadd.f32 %v1471, %v1614
      %v1616 = vpop.f32.mrf.mxu0
      %1617 = vmatprep.mubr.f32.mxu0 0.0
      %1618 = vmatmul.mubr.f32.gmra.mxu0 %v1438
      %v1619 = vpop.f32.mrf.mxu0
      %v1620 = vadd.f32 %v1471, %v1619
      %v1621 = vpop.f32.mrf.mxu0
      %1622 = vmatprep.mubr.f32.mxu0 0.0
      %1623 = vmatmul.mubr.f32.gmra.mxu0 %v1439
      %v1624 = vpop.f32.mrf.mxu0
      %v1625 = vadd.f32 %v1471, %v1624
      %v1626 = vpop.f32.mrf.mxu0
      %1627 = vmatprep.mubr.f32.mxu0 0.0
      %1628 = vmatmul.mubr.f32.gmra.mxu0 %v1440
      %v1629 = vpop.f32.mrf.mxu0
      %v1630 = vadd.f32 %v1471, %v1629
      %v1631 = vpop.f32.mrf.mxu0
      %1632 = vmatprep.mubr.f32.mxu0 0.0
      %1633 = vmatmul.mubr.f32.gmra.mxu0 %v1441
      %v1634 = vpop.f32.mrf.mxu0
      %v1635 = vadd.f32 %v1471, %v1634
      %v1636 = vpop.f32.mrf.mxu0
      %1637 = vmatprep.mubr.f32.mxu0 0.0
      %1638 = vmatmul.mubr.f32.gmra.mxu0 %v1442
      %v1639 = vpop.f32.mrf.mxu0
      %v1640 = vadd.f32 %v1471, %v1639
      %v1641 = vpop.f32.mrf.mxu0
      %1642 = vmatprep.mubr.f32.mxu0 0.0
      %1643 = vmatmul.mubr.f32.gmra.mxu0 %v1443
      %v1644 = vpop.f32.mrf.mxu0
      %v1645 = vadd.f32 %v1471, %v1644
      %v1646 = vpop.f32.mrf.mxu0
      %1647 = vmatprep.mubr.f32.mxu0 0.0
      %1648 = vmatmul.mubr.f32.gmra.mxu0 %v1444
      %v1649 = vpop.f32.mrf.mxu0
      %v1650 = vadd.f32 %v1471, %v1649
      %v1651 = vpop.f32.mrf.mxu0
      %1652 = vmatprep.mubr.f32.mxu0 0.0
      %1653 = vmatmul.mubr.f32.gmra.mxu0 %v1445
      %v1654 = vpop.f32.mrf.mxu0
      %v1655 = vadd.f32 %v1471, %v1654
      %v1656 = vpop.f32.mrf.mxu0
      %1657 = vmatprep.mubr.f32.mxu0 0.0
      %1658 = vmatmul.mubr.f32.gmra.mxu0 %v1446
      %v1659 = vpop.f32.mrf.mxu0
      %v1660 = vadd.f32 %v1471, %v1659
      %v1661 = vpop.f32.mrf.mxu0
      %1662 = vmatprep.mubr.f32.mxu0 0.0
      %1663 = vmatmul.mubr.f32.gmra.mxu0 %v1447
      %v1664 = vpop.f32.mrf.mxu0
      %v1665 = vadd.f32 %v1471, %v1664
      %v1666 = vpop.f32.mrf.mxu0
      %1667 = vmatprep.mubr.f32.mxu0 0.0
      %1668 = vmatmul.mubr.f32.gmra.mxu0 %v1448
      %v1669 = vpop.f32.mrf.mxu0
      %v1670 = vadd.f32 %v1471, %v1669
      %v1671 = vpop.f32.mrf.mxu0
      %1672 = vmatprep.mubr.f32.mxu0 0.0
      %1673 = vmatmul.mubr.f32.gmra.mxu0 %v1449
      %v1674 = vpop.f32.mrf.mxu0
      %v1675 = vadd.f32 %v1471, %v1674
      %v1676 = vpop.f32.mrf.mxu0
      %1677 = vdwg.mxu0
      %vm1678 = vcmp.gt.f32.partialorder %v1540, 0.0
      %vm1679 = vcmp.gt.f32.partialorder %v1545, 0.0
      %vm1680 = vcmp.gt.f32.partialorder %v1550, 0.0
      %vm1681 = vcmp.gt.f32.partialorder %v1555, 0.0
      %vm1682 = vcmp.gt.f32.partialorder %v1560, 0.0
      %vm1683 = vcmp.gt.f32.partialorder %v1565, 0.0
      %vm1684 = vcmp.gt.f32.partialorder %v1570, 0.0
      %vm1685 = vcmp.gt.f32.partialorder %v1575, 0.0
      %vm1686 = vcmp.gt.f32.partialorder %v1580, 0.0
      %vm1687 = vcmp.gt.f32.partialorder %v1585, 0.0
      %vm1688 = vcmp.gt.f32.partialorder %v1590, 0.0
      %vm1689 = vcmp.gt.f32.partialorder %v1595, 0.0
      %vm1690 = vcmp.gt.f32.partialorder %v1600, 0.0
      %vm1691 = vcmp.gt.f32.partialorder %v1605, 0.0
      %vm1692 = vcmp.gt.f32.partialorder %v1610, 0.0
      %vm1693 = vcmp.gt.f32.partialorder %v1615, 0.0
      %vm1694 = vcmp.gt.f32.partialorder %v1620, 0.0
      %vm1695 = vcmp.gt.f32.partialorder %v1625, 0.0
      %vm1696 = vcmp.gt.f32.partialorder %v1630, 0.0
      %vm1697 = vcmp.gt.f32.partialorder %v1635, 0.0
      %vm1698 = vcmp.gt.f32.partialorder %v1640, 0.0
      %vm1699 = vcmp.gt.f32.partialorder %v1645, 0.0
      %vm1700 = vcmp.gt.f32.partialorder %v1650, 0.0
      %vm1701 = vcmp.gt.f32.partialorder %v1655, 0.0
      %vm1702 = vcmp.gt.f32.partialorder %v1660, 0.0
      %vm1703 = vcmp.gt.f32.partialorder %v1665, 0.0
      %vm1704 = vcmp.gt.f32.partialorder %v1670, 0.0
      %vm1705 = vcmp.gt.f32.partialorder %v1675, 0.0
      %v1706 = vmul.f32 %v1540, 0.2
      %v1707 = vmul.f32 %v1545, 0.2
      %v1708 = vmul.f32 %v1550, 0.2
      %v1709 = vmul.f32 %v1555, 0.2
      %v1710 = vmul.f32 %v1560, 0.2
      %v1711 = vmul.f32 %v1565, 0.2
      %v1712 = vmul.f32 %v1570, 0.2
      %v1713 = vmul.f32 %v1575, 0.2
      %v1714 = vmul.f32 %v1580, 0.2
      %v1715 = vmul.f32 %v1585, 0.2
      %v1716 = vmul.f32 %v1590, 0.2
      %v1717 = vmul.f32 %v1595, 0.2
      %v1718 = vmul.f32 %v1600, 0.2
      %v1719 = vmul.f32 %v1605, 0.2
      %v1720 = vmul.f32 %v1610, 0.2
      %v1721 = vmul.f32 %v1615, 0.2
      %v1722 = vmul.f32 %v1620, 0.2
      %v1723 = vmul.f32 %v1625, 0.2
      %v1724 = vmul.f32 %v1630, 0.2
      %v1725 = vmul.f32 %v1635, 0.2
      %v1726 = vmul.f32 %v1640, 0.2
      %v1727 = vmul.f32 %v1645, 0.2
      %v1728 = vmul.f32 %v1650, 0.2
      %v1729 = vmul.f32 %v1655, 0.2
      %v1730 = vmul.f32 %v1660, 0.2
      %v1731 = vmul.f32 %v1665, 0.2
      %v1732 = vmul.f32 %v1670, 0.2
      %v1733 = vmul.f32 %v1675, 0.2
      %v1734 = vsel %vm1678, %v1540, %v1706
      %v1735 = vsel %vm1679, %v1545, %v1707
      %v1736 = vsel %vm1680, %v1550, %v1708
      %v1737 = vsel %vm1681, %v1555, %v1709
      %v1738 = vsel %vm1682, %v1560, %v1710
      %v1739 = vsel %vm1683, %v1565, %v1711
      %v1740 = vsel %vm1684, %v1570, %v1712
      %v1741 = vsel %vm1685, %v1575, %v1713
      %v1742 = vsel %vm1686, %v1580, %v1714
      %v1743 = vsel %vm1687, %v1585, %v1715
      %v1744 = vsel %vm1688, %v1590, %v1716
      %v1745 = vsel %vm1689, %v1595, %v1717
      %v1746 = vsel %vm1690, %v1600, %v1718
      %v1747 = vsel %vm1691, %v1605, %v1719
      %v1748 = vsel %vm1692, %v1610, %v1720
      %v1749 = vsel %vm1693, %v1615, %v1721
      %v1750 = vsel %vm1694, %v1620, %v1722
      %v1751 = vsel %vm1695, %v1625, %v1723
      %v1752 = vsel %vm1696, %v1630, %v1724
      %v1753 = vsel %vm1697, %v1635, %v1725
      %v1754 = vsel %vm1698, %v1640, %v1726
      %v1755 = vsel %vm1699, %v1645, %v1727
      %v1756 = vsel %vm1700, %v1650, %v1728
      %v1757 = vsel %vm1701, %v1655, %v1729
      %v1758 = vsel %vm1702, %v1660, %v1730
      %v1759 = vsel %vm1703, %v1665, %v1731
      %v1760 = vsel %vm1704, %v1670, %v1732
      %v1761 = vsel %vm1705, %v1675, %v1733
      %1762 = vst [vmem:[%s221] sm:$0xff] %v1734
      %1763 = vst [vmem:[%s221 + $0x8] sm:$0xff] %v1735
      %1764 = vst [vmem:[%s221 + $0x10] sm:$0xff] %v1736
      %1765 = vst [vmem:[%s221 + $0x18] sm:$0xff] %v1737
      %1766 = vst [vmem:[%s221 + $0x20] sm:$0xff] %v1738
      %1767 = vst [vmem:[%s221 + $0x28] sm:$0xff] %v1739
      %1768 = vst [vmem:[%s221 + $0x30] sm:$0xff] %v1740
      %1769 = vst [vmem:[%s221 + $0x38] sm:$0xff] %v1741
      %1770 = vst [vmem:[%s221 + $0x40] sm:$0xff] %v1742
      %1771 = vst [vmem:[%s221 + $0x48] sm:$0xff] %v1743
      %1772 = vst [vmem:[%s221 + $0x50] sm:$0xff] %v1744
      %1773 = vst [vmem:[%s221 + $0x58] sm:$0xff] %v1745
      %1774 = vst [vmem:[%s221 + $0x60] sm:$0xff] %v1746
      %1775 = vst [vmem:[%s221 + $0x68] sm:$0xff] %v1747
      %1776 = vst [vmem:[%s221 + $0x70] sm:$0xff] %v1748
      %1777 = vst [vmem:[%s221 + $0x78] sm:$0xff] %v1749
      %1778 = vst [vmem:[%s221 + $0x80] sm:$0xff] %v1750
      %1779 = vst [vmem:[%s221 + $0x88] sm:$0xff] %v1751
      %1780 = vst [vmem:[%s221 + $0x90] sm:$0xff] %v1752
      %1781 = vst [vmem:[%s221 + $0x98] sm:$0xff] %v1753
      %1782 = vst [vmem:[%s221 + $0xa0] sm:$0xff] %v1754
      %1783 = vst [vmem:[%s221 + $0xa8] sm:$0xff] %v1755
      %1784 = vst [vmem:[%s221 + $0xb0] sm:$0xff] %v1756
      %1785 = vst [vmem:[%s221 + $0xb8] sm:$0xff] %v1757
      %1786 = vst [vmem:[%s221 + $0xc0] sm:$0xff] %v1758
      %1787 = vst [vmem:[%s221 + $0xc8] sm:$0xff] %v1759
      %1788 = vst [vmem:[%s221 + $0xd0] sm:$0xff] %v1760
      %1789 = vst [vmem:[%s221 + $0xd8] sm:$0xff] %v1761
      %p1790 = scmp.lt.s32.totalorder %s18, 1
      %s1791 = scalar_select %p1790, %s18, 1
      %p1792 = scmp.lt.s32.totalorder %s19, 0
      %s1793 = scalar_select %p1792, %s19, 0
      %s1794 = smul.addr %s1791, 28
      %s1795 = sadd.s32 %s1793, %s1794
      %s1796 = smul.addr %s1795, 8
      %s1797 = scalar_lea.vmem %s3, %s1796
      // Predicated region
      $region33: #{conv_block.1} parent=31 // pred_check
        %p1798 = pneg %p124
      $region34: #{conv_block.1} parent=31 // pred_check_branch
        %1800 = sbr.rel (%p1798) target = $region36
      $region35: #{conv_block.1} parent=31 // pred_region
        _
      $region36: #{conv_block.1} parent=31 // pred_fallthru
        _
    $region32: #{conv_block.1} parent=5 // pred_fallthru
      _
    %p1801 = scmp.le.s32.totalorder 2, %s9
    // Predicated region
    $region37: #{conv_block.1} parent=5 // pred_check
      %p1802 = pneg %p1801
    $region38: #{conv_block.1} parent=5 // pred_check_branch
      %1804 = sbr.rel (%p1802) target = $region40
    $region39: #{conv_block.1} parent=5 // pred_region
      %s1805 = ssub.s32 %s9, 2
      // Predicated region
      $region41: #{conv_block.1} parent=39 // pred_check
        %p1806 = pneg %p130
      $region42: #{conv_block.1} parent=39 // pred_check_branch
        %1808 = sbr.rel (%p1806) target = $region44
      $region43: #{conv_block.1} parent=39 // pred_region
        %p1809 = scmp.lt.s32.totalorder %s20, 1
        %s1810 = scalar_select %p1809, %s20, 1
        %p1811 = scmp.lt.s32.totalorder %s21, 0
        %s1812 = scalar_select %p1811, %s21, 0
        %s1813 = smul.addr %s1810, 28
        %s1814 = sadd.s32 %s1812, %s1813
        %s1815 = smul.addr %s1814, 8
        %s1816 = scalar_lea.vmem %s3, %s1815
      $region44: #{conv_block.1} parent=39 // pred_fallthru
        _
    $region40: #{conv_block.1} parent=5 // pred_fallthru
      _
  $region6: #{conv_block.1} parent=0 // loop_footer
    %s13 = sadd.s32 1, %s9
  $region7: #{conv_block.1} parent=0 // loop_footer_branch
    %8 = sbr.rel target = $region3
  $region8: #{conv_block.1} parent=0 // loop_exit
    _

</llo_original>
